<compile_context>
chip_gen: v7x
topology: tpu7x:2x2x1
jax: 0.10.0
libtpu: 0.0.40
codegen_flags: <defaults>
</compile_context>

<pallas_src>
import functools
import math

import jax
import jax.numpy as jnp
from jax import lax
from jax.experimental import pallas as pl
from jax.experimental.pallas import tpu as pltpu

BN_EPS = 1e-5          # PyTorch BatchNorm default eps
L2_EPS = 1e-12         # F.normalize default eps
LANE = 128
SUBLANE_BF16 = 16
VMEM_LIMIT = 48 * 1024 * 1024     # below v7x's 64 MiB physical VMEM (128 on v5e/v6e)
TILE_BUDGET = 32 * 1024 * 1024    # working-set budget used to size tiles


def _round_up(x, m):
    return (x + m - 1) // m * m


def _pad_dim(a, axis, target, value=0.0):
    pad = target - a.shape[axis]
    if pad == 0:
        return a
    widths = [(0, 0)] * a.ndim
    widths[axis] = (0, pad)
    return jnp.pad(a, widths, constant_values=value)


def _largest_divisor_tile(total, step, cap):
    """Largest multiple of `step` dividing `total`, at most `cap` (total % step == 0)."""
    cap = max(step, min(cap, total))
    for cand in range(cap - cap % step, step - 1, -step):
        if total % cand == 0:
            return cand
    return step


# --------------------------------------------------------------------------- #
# Kernel 1 (stem): folded conv+BN matmul + SiLU + fused AdaptiveAvgPool2d(1)
#   grid = (N, HW // pixel_tile); output (N, 1, C_pad) pooled means.
# --------------------------------------------------------------------------- #
def _stem_matmul_silu_pool_kernel(p_ref, w_ref, b_ref, o_ref, *, inv_hw):
    t = pl.program_id(1)

    @pl.when(t == 0)
    def _():
        o_ref[...] = jnp.zeros_like(o_ref)

    # (pixel_tile, K_pad) bf16 @ (K_pad, C_pad) bf16 -> f32 on the MXU
    acc = jnp.dot(p_ref[0], w_ref[...], preferred_element_type=jnp.float32)
    y = acc + b_ref[...]                  # BN folded into weight/bias already
    y = y * jax.nn.sigmoid(y)             # SiLU

    # fused global average pool: accumulate channel sums across pixel tiles
    o_ref[...] = o_ref[...] + jnp.sum(y, axis=0, keepdims=True).reshape(1, 1, -1)

    @pl.when(t == pl.num_programs(1) - 1)
    def _():
        o_ref[...] = o_ref[...] * inv_hw  # sums -> mean


# --------------------------------------------------------------------------- #
# Kernel 2 (head prologue): bn1 -> Dropout2d (eval = id) -> fc1 -> bn2 folded
# into one affine, then F.normalize(dim=1); emits bf16 features once.
# --------------------------------------------------------------------------- #
def _head_features_kernel(pooled_ref, w_ref, b_ref, feat_ref):
    x = pooled_ref[...][:, 0, :]                                  # (N, C_pad) f32
    h = jnp.dot(x.astype(jnp.bfloat16), w_ref[...],
                preferred_element_type=jnp.float32) + b_ref[...]  # (N, CS_pad)
    norm = jnp.maximum(jnp.sqrt(jnp.sum(h * h, axis=1, keepdims=True)), L2_EPS)
    feat_ref[...] = (h / norm).astype(feat_ref.dtype)


# --------------------------------------------------------------------------- #
# Kernel 3 (ArcFace): cos_th = feat @ normalize(W).T -> margin -> one-hot -> *s
#   grid = (OF_pad // tile_of,), fully parallel (no cross-tile carry).
# --------------------------------------------------------------------------- #
def _arcface_kernel(feat_ref, awn_ref, lbl_ref, o_ref,
                    *, cos_m, sin_m, th, mm, s, tile_of):
    j = pl.program_id(0)
    cos_th = jnp.dot(feat_ref[...], awn_ref[...],
                     preferred_element_type=jnp.float32)          # (N, TILE_OF)
    cos_th = jnp.clip(cos_th, -1.0, 1.0)                          # matches .clamp(-1, 1)
    sin_th = jnp.sqrt(jnp.maximum(1.0 - cos_th * cos_th, 0.0))
    cos_th_m = cos_th * cos_m - sin_th * sin_m
    # torch.where(cos_th > th, ., .) plus the in-place overwrite on
    # (cos_th - th) <= 0 collapse to a single select:
    cos_th_m = jnp.where(cos_th > th, cos_th_m, cos_th - mm)

    labels = lbl_ref[...]                                         # (N, 1) int32
    cols = j * tile_of + lax.broadcasted_iota(jnp.int32, cos_th.shape, 1)
    onehot = (cols == labels).astype(jnp.float32)
    o_ref[...] = (onehot * cos_th_m + (1.0 - onehot) * cos_th) * s


# --------------------------------------------------------------------------- #
# Parameters (PyTorch-equivalent, unpadded)
# --------------------------------------------------------------------------- #
def init_params(key, *, cin, in_features, channel_size, out_feature):
    ks = jax.random.split(key, 16)
    p = {}
    p["conv_w"] = jax.random.normal(ks[0], (3, 3, cin, in_features), jnp.float32) * 0.1
    p["stem_g"] = 1.0 + 0.1 * jax.random.normal(ks[1], (1, in_features), jnp.float32)
    p["stem_b"] = 0.1 * jax.random.normal(ks[2], (1, in_features), jnp.float32)
    p["stem_m"] = 0.1 * jax.random.normal(ks[3], (1, in_features), jnp.float32)
    p["stem_v"] = jax.random.uniform(ks[4], (1, in_features), jnp.float32, 0.5, 1.5)
    p["bn1_g"] = 1.0 + 0.1 * jax.random.normal(ks[5], (1, in_features), jnp.float32)
    p["bn1_b"] = 0.1 * jax.random.normal(ks[6], (1, in_features), jnp.float32)
    p["bn1_m"] = 0.1 * jax.random.normal(ks[7], (1, in_features), jnp.float32)
    p["bn1_v"] = jax.random.uniform(ks[8], (1, in_features), jnp.float32, 0.5, 1.5)
    bound = 1.0 / math.sqrt(in_features)
    p["fc1_wt"] = jax.random.uniform(ks[9], (in_features, channel_size), jnp.float32,
                                     -bound, bound)
    p["fc1_b"] = jax.random.uniform(ks[10], (1, channel_size), jnp.float32,
                                    -bound, bound)
    p["bn2_g"] = 1.0 + 0.1 * jax.random.normal(ks[11], (1, channel_size), jnp.float32)
    p["bn2_b"] = 0.1 * jax.random.normal(ks[12], (1, channel_size), jnp.float32)
    p["bn2_m"] = 0.1 * jax.random.normal(ks[13], (1, channel_size), jnp.float32)
    p["bn2_v"] = jax.random.uniform(ks[14], (1, channel_size), jnp.float32, 0.5, 1.5)
    std = math.sqrt(2.0 / (channel_size + out_feature))   # xavier_normal_
    p["arc_w"] = std * jax.random.normal(ks[15], (out_feature, channel_size),
                                         jnp.float32)
    return p


# --------------------------------------------------------------------------- #
# Wrapper
# --------------------------------------------------------------------------- #
def efficientnet_arcface_forward(x_nchw, labels, params, *, s=10.0, margin=0.5):
    """x_nchw: (N, Cin, H, W) f32; labels: (N,) int in [0, out_feature)."""
    cos_m, sin_m = math.cos(margin), math.sin(margin)
    th = math.cos(math.pi - margin)
    mm = math.sin(math.pi - margin) * margin

    n, cin, h, w = x_nchw.shape
    c_feat = params["conv_w"].shape[-1]
    channel_size = params["fc1_wt"].shape[-1]
    out_feature = params["arc_w"].shape[0]
    hw = h * w

    # lane-dense padded sizes
    c_pad = _round_up(c_feat, LANE)
    cs_pad = _round_up(channel_size, LANE)
    of_pad = _round_up(out_feature, LANE)
    k_pad = _round_up(9 * cin, LANE)

    # ----- stem: wrapper-side im2col -> lane-dense (N, HW, K_pad) patch slab --
    # (XLA glue; the kernel only ever sees lane-aligned bf16 slabs.)
    x = jnp.transpose(x_nchw, (0, 2, 3, 1)).astype(jnp.float32)        # NHWC
    xp = jnp.pad(x, ((0, 0), (1, 1), (1, 1), (0, 0)))                  # (N,H+2,W+2,Cin)
    patches = [xp[:, kh:kh + h, kw:kw + w, :]
               for kh in range(3) for kw in range(3)]                  # (kh,kw,cin) order
    patch = jnp.concatenate(patches, axis=-1).reshape(n, hw, 9 * cin)
    patch = _pad_dim(patch, 2, k_pad).astype(jnp.bfloat16)             # (N, HW, K_pad)

    # fold conv BN (inference form) into the im2col weight + one bias row
    scale = params["stem_g"] * lax.rsqrt(params["stem_v"] + BN_EPS)    # (1, C)
    shift = params["stem_b"] - params["stem_m"] * scale
    w_stem = params["conv_w"].reshape(9 * cin, c_feat) * scale         # (9*cin, C)
    w_stem = _pad_dim(_pad_dim(w_stem, 0, k_pad), 1, c_pad).astype(jnp.bfloat16)
    b_stem = _pad_dim(shift, 1, c_pad)                                 # (1, C_pad)

    # pixel tile: target MXU M in [256, 1024], multiple of 16 (bf16 sublane),
    # sized against the VMEM budget (dbl-buffered patch slab + f32 intermediates).
    per_pixel = 2 * (k_pad * 2) + 2 * (c_pad * 4)
    resident = 2 * (k_pad * c_pad * 2) + 4 * (c_pad * 4)
    tp_cap = max(SUBLANE_BF16,
                 min(1024, (TILE_BUDGET - resident) // max(per_pixel, 1)))
    tp_cap -= tp_cap % SUBLANE_BF16
    if hw % SUBLANE_BF16 == 0:
        tp = _largest_divisor_tile(hw, SUBLANE_BF16, tp_cap)
    else:
        tp = hw   # full-extent block is exempt from the (16, 128) rule
    n_tiles = hw // tp

    stem_cost = pl.CostEstimate(
        flops=2 * n * hw * k_pad * c_pad + 5 * n * hw * c_pad,
        transcendentals=n * hw * c_pad,
        bytes_accessed=int(patch.size * 2 + w_stem.size * 2 + n * c_pad * 4),
    )

    pooled = pl.pallas_call(
        functools.partial(_stem_matmul_silu_pool_kernel, inv_hw=1.0 / hw),
        grid=(n, n_tiles),
        in_specs=[
            pl.BlockSpec((1, tp, k_pad), lambda b, t: (b, t, 0)),
            pl.BlockSpec((k_pad, c_pad), lambda b, t: (0, 0)),
            pl.BlockSpec((1, c_pad), lambda b, t: (0, 0)),
        ],
        out_specs=pl.BlockSpec((1, 1, c_pad), lambda b, t: (b, 0, 0)),
        out_shape=jax.ShapeDtypeStruct((n, 1, c_pad), jnp.float32),
        compiler_params=pltpu.CompilerParams(
            dimension_semantics=("parallel", "arbitrary"),
            vmem_limit_bytes=VMEM_LIMIT),
        cost_estimate=stem_cost,
    )(patch, w_stem, b_stem)

    # ----- head prologue: fold bn1 / fc1 / bn2 into one affine -----------------
    a1 = params["bn1_g"] * lax.rsqrt(params["bn1_v"] + BN_EPS)         # (1, C)
    c1 = params["bn1_b"] - params["bn1_m"] * a1
    a2 = params["bn2_g"] * lax.rsqrt(params["bn2_v"] + BN_EPS)         # (1, CS)
    c2 = params["bn2_b"] - params["bn2_m"] * a2
    w_eff = (a1.reshape(-1, 1) * params["fc1_wt"]) * a2                # (C, CS)
    b_eff = a2 * (c1 @ params["fc1_wt"] + params["fc1_b"]) + c2        # (1, CS)
    w_eff = _pad_dim(_pad_dim(w_eff, 0, c_pad), 1, cs_pad).astype(jnp.bfloat16)
    b_eff = _pad_dim(b_eff, 1, cs_pad)

    feat = pl.pallas_call(
        _head_features_kernel,
        grid=(1,),
        in_specs=[
            pl.BlockSpec((n, 1, c_pad), lambda i: (0, 0, 0)),
            pl.BlockSpec((c_pad, cs_pad), lambda i: (0, 0)),
            pl.BlockSpec((1, cs_pad), lambda i: (0, 0)),
        ],
        out_specs=pl.BlockSpec((n, cs_pad), lambda i: (0, 0)),
        out_shape=jax.ShapeDtypeStruct((n, cs_pad), jnp.bfloat16),
        compiler_params=pltpu.CompilerParams(
            dimension_semantics=("arbitrary",),
            vmem_limit_bytes=VMEM_LIMIT),
        cost_estimate=pl.CostEstimate(
            flops=2 * n * c_pad * cs_pad,
            transcendentals=n,
            bytes_accessed=int(n * c_pad * 4 + c_pad * cs_pad * 2 + n * cs_pad * 2)),
    )(pooled, w_eff, b_eff)

    # ----- ArcFace: weight L2-normalization hoisted (constant per forward) -----
    aw = params["arc_w"]
    awn = aw / jnp.maximum(jnp.sqrt(jnp.sum(aw * aw, axis=1, keepdims=True)), L2_EPS)
    awn = _pad_dim(_pad_dim(awn, 1, cs_pad), 0, of_pad)
    awn_t = jnp.transpose(awn).astype(jnp.bfloat16)                    # (CS_pad, OF_pad)

    # NOTE: labels must lie in [0, out_feature); out-of-range labels silently
    # receive no margin (PyTorch's scatter_ would raise instead).
    lbl2d = labels.astype(jnp.int32).reshape(n, 1)

    # OF tile sized from the VMEM budget (awn tile + logits tile, double-buffered)
    per_col = 2 * (cs_pad * 2) + 2 * (n * 4)
    resident = 2 * (n * cs_pad * 2) + 2 * (n * 4)
    of_cap = max(LANE, min(2048, (TILE_BUDGET - resident) // max(per_col, 1)))
    of_cap -= of_cap % LANE
    tile_of = _largest_divisor_tile(of_pad, LANE, of_cap)

    logits = pl.pallas_call(
        functools.partial(_arcface_kernel, cos_m=cos_m, sin_m=sin_m,
                          th=th, mm=mm, s=s, tile_of=tile_of),
        grid=(of_pad // tile_of,),
        in_specs=[
            pl.BlockSpec((n, cs_pad), lambda j: (0, 0)),
            pl.BlockSpec((cs_pad, tile_of), lambda j: (0, j)),
            pl.BlockSpec((n, 1), lambda j: (0, 0)),
        ],
        out_specs=pl.BlockSpec((n, tile_of), lambda j: (0, j)),
        out_shape=jax.ShapeDtypeStruct((n, of_pad), jnp.float32),
        compiler_params=pltpu.CompilerParams(
            # no cross-tile carry -> megacore-parallel OF axis (2 TCs on v7x)
            dimension_semantics=("parallel",),
            vmem_limit_bytes=VMEM_LIMIT),
        cost_estimate=pl.CostEstimate(
            flops=2 * n * cs_pad * of_pad + 12 * n * of_pad,
            transcendentals=n * of_pad,
            bytes_accessed=int(n * cs_pad * 2 + cs_pad * of_pad * 2
                               + n * 4 + n * of_pad * 4)),
    )(feat, awn_t, lbl2d)

    return logits[:, :out_feature]


if __name__ == "__main__":
    N, CIN, H, W = 2, 3, 16, 16
    IN_FEATURES = 32      # stand-in for backbone.classifier.in_features
    CHANNEL_SIZE = 16
    OUT_FEATURE = 8

    key = jax.random.PRNGKey(0)
    kx, kl, kp = jax.random.split(key, 3)
    x = jax.random.normal(kx, (N, CIN, H, W), jnp.float32)
    labels = jax.random.randint(kl, (N,), 0, OUT_FEATURE, jnp.int32)
    params = init_params(kp, cin=CIN, in_features=IN_FEATURES,
                         channel_size=CHANNEL_SIZE, out_feature=OUT_FEATURE)

    fwd = jax.jit(functools.partial(efficientnet_arcface_forward, s=10.0, margin=0.5))
    out = fwd(x, labels, params)
    jax.block_until_ready(out)
    assert out.shape == (N, OUT_FEATURE) and out.dtype == jnp.float32
    assert bool(jnp.all(jnp.isfinite(out)))
    print("KERNEL_OK")
</pallas_src>

<mosaic_0001>
module attributes {stable_mosaic.version = 11 : i64} {
  func.func @_stem_matmul_silu_pool_kernel(%arg0: i32, %arg1: i32, %arg2: memref<1x256x128xbf16, #tpu.memory_space<vmem>>, %arg3: memref<128x128xbf16, #tpu.memory_space<vmem>>, %arg4: memref<1x128xf32, #tpu.memory_space<vmem>>, %arg5: memref<1x1x128xf32, #tpu.memory_space<vmem>>) attributes {dimension_semantics = [#tpu.dimension_semantics<parallel>, #tpu.dimension_semantics<arbitrary>], iteration_bounds = array<i64: 2, 1>, scalar_prefetch = 0 : i64, scratch_operands = 0 : i64, tpu.core_type = #tpu.core_type<tc>, window_params = [{transform_indices = @transform_0, window_bounds = array<i64: 1, 256, 128>}, {pipeline_mode = #tpu.pipeline_mode<synchronous>, transform_indices = @transform_1, window_bounds = array<i64: 128, 128>}, {pipeline_mode = #tpu.pipeline_mode<synchronous>, transform_indices = @transform_2, window_bounds = array<i64: 1, 128>}, {transform_indices = @transform_3, window_bounds = array<i64: 1, 1, 128>}]} {
    %c0_i32 = arith.constant 0 : i32
    %0 = arith.cmpi eq, %arg1, %c0_i32 : i32
    %1 = arith.extui %0 : i1 to i32
    %c0_i32_0 = arith.constant 0 : i32
    %2 = arith.cmpi ne, %1, %c0_i32_0 : i32
    scf.if %2 {
      %cst_17 = arith.constant 0.000000e+00 : f32
      %25 = vector.broadcast %cst_17 : f32 to vector<1x1x128xf32>
      %c0_18 = arith.constant 0 : index
      %c0_19 = arith.constant 0 : index
      %c0_20 = arith.constant 0 : index
      %26 = vector.load %arg5[%c0_18, %c0_19, %c0_20] : memref<1x1x128xf32, #tpu.memory_space<vmem>>, vector<1x1x128xf32>
      tpu.vector_store %arg5[%c0_18, %c0_19, %c0_20], %25 {strides = array<i32>} : memref<1x1x128xf32, #tpu.memory_space<vmem>>, vector<1x1x128xf32>,
    } else {
    }
    %c0 = arith.constant 0 : index
    %c0_1 = arith.constant 0 : index
    %c0_2 = arith.constant 0 : index
    %3 = vector.load %arg2[%c0, %c0_1, %c0_2] : memref<1x256x128xbf16, #tpu.memory_space<vmem>>, vector<1x256x128xbf16>
    %4 = vector.shape_cast %3 : vector<1x256x128xbf16> to vector<256x128xbf16>
    %c0_3 = arith.constant 0 : index
    %c0_4 = arith.constant 0 : index
    %5 = vector.load %arg3[%c0_3, %c0_4] : memref<128x128xbf16, #tpu.memory_space<vmem>>, vector<128x128xbf16>
    %cst = arith.constant dense<0.000000e+00> : vector<256x128xf32>
    %6 = tpu.matmul %4, %5, %cst {dimension_numbers = #tpu.dot_dimension_numbers<[1], [0], [0], [1], [0, 0, 1, 1], [], []>} : vector<256x128xbf16>, vector<128x128xbf16>, vector<256x128xf32> -> vector<256x128xf32>
    %c0_5 = arith.constant 0 : index
    %c0_6 = arith.constant 0 : index
    %7 = vector.load %arg4[%c0_5, %c0_6] : memref<1x128xf32, #tpu.memory_space<vmem>>, vector<1x128xf32>
    %8 = vector.broadcast %7 : vector<1x128xf32> to vector<256x128xf32>
    %9 = arith.addf %6, %8 : vector<256x128xf32>
    %10 = arith.negf %9 : vector<256x128xf32>
    %11 = math.exp %10 : vector<256x128xf32>
    %cst_7 = arith.constant 1.000000e+00 : f32
    %12 = vector.broadcast %cst_7 : f32 to vector<256x128xf32>
    %13 = arith.addf %12, %11 : vector<256x128xf32>
    %14 = arith.divf %12, %13 : vector<256x128xf32>
    %15 = arith.mulf %9, %14 : vector<256x128xf32>
    %c0_8 = arith.constant 0 : index
    %c0_9 = arith.constant 0 : index
    %c0_10 = arith.constant 0 : index
    %16 = vector.load %arg5[%c0_8, %c0_9, %c0_10] : memref<1x1x128xf32, #tpu.memory_space<vmem>>, vector<1x1x128xf32>
    %cst_11 = arith.constant dense<0.000000e+00> : vector<128xf32>
    %17 = vector.multi_reduction <add>, %15, %cst_11 [0] : vector<256x128xf32> to vector<128xf32>
    %18 = vector.shape_cast %17 : vector<128xf32> to vector<1x128xf32>
    %19 = vector.shape_cast %18 : vector<1x128xf32> to vector<1x1x128xf32>
    %20 = arith.addf %16, %19 : vector<1x1x128xf32>
    %c0_12 = arith.constant 0 : index
    %c0_13 = arith.constant 0 : index
    %c0_14 = arith.constant 0 : index
    %21 = vector.load %arg5[%c0_12, %c0_13, %c0_14] : memref<1x1x128xf32, #tpu.memory_space<vmem>>, vector<1x1x128xf32>
    tpu.vector_store %arg5[%c0_12, %c0_13, %c0_14], %20 {strides = array<i32>} : memref<1x1x128xf32, #tpu.memory_space<vmem>>, vector<1x1x128xf32>,
    %c0_i32_15 = arith.constant 0 : i32
    %22 = arith.cmpi eq, %arg1, %c0_i32_15 : i32
    %23 = arith.extui %22 : i1 to i32
    %c0_i32_16 = arith.constant 0 : i32
    %24 = arith.cmpi ne, %23, %c0_i32_16 : i32
    scf.if %24 {
      %c0_17 = arith.constant 0 : index
      %c0_18 = arith.constant 0 : index
      %c0_19 = arith.constant 0 : index
      %25 = vector.load %arg5[%c0_17, %c0_18, %c0_19] : memref<1x1x128xf32, #tpu.memory_space<vmem>>, vector<1x1x128xf32>
      %cst_20 = arith.constant 3.906250e-03 : f32
      %26 = vector.broadcast %cst_20 : f32 to vector<1x1x128xf32>
      %27 = arith.mulf %25, %26 : vector<1x1x128xf32>
      %c0_21 = arith.constant 0 : index
      %c0_22 = arith.constant 0 : index
      %c0_23 = arith.constant 0 : index
      %28 = vector.load %arg5[%c0_21, %c0_22, %c0_23] : memref<1x1x128xf32, #tpu.memory_space<vmem>>, vector<1x1x128xf32>
      tpu.vector_store %arg5[%c0_21, %c0_22, %c0_23], %27 {strides = array<i32>} : memref<1x1x128xf32, #tpu.memory_space<vmem>>, vector<1x1x128xf32>,
    } else {
    }
    return
  }
  func.func @transform_0(%arg0: i32, %arg1: i32) -> (i32, i32, i32) {
    %c0_i32 = arith.constant 0 : i32
    %c0_i32_0 = arith.constant 0 : i32
    return %arg0, %arg1, %c0_i32 : i32, i32, i32
  }
  func.func @transform_1(%arg0: i32, %arg1: i32) -> (i32, i32) {
    %c0_i32 = arith.constant 0 : i32
    %c0_i32_0 = arith.constant 0 : i32
    %c0_i32_1 = arith.constant 0 : i32
    return %c0_i32, %c0_i32_0 : i32, i32
  }
  func.func @transform_2(%arg0: i32, %arg1: i32) -> (i32, i32) {
    %c0_i32 = arith.constant 0 : i32
    %c0_i32_0 = arith.constant 0 : i32
    %c0_i32_1 = arith.constant 0 : i32
    return %c0_i32, %c0_i32_0 : i32, i32
  }
  func.func @transform_3(%arg0: i32, %arg1: i32) -> (i32, i32, i32) {
    %c0_i32 = arith.constant 0 : i32
    %c0_i32_0 = arith.constant 0 : i32
    %c0_i32_1 = arith.constant 0 : i32
    return %arg0, %c0_i32, %c0_i32_0 : i32, i32, i32
  }
}

module attributes {stable_mosaic.version = 11 : i64} {
  func.func @_head_features_kernel(%arg0: i32, %arg1: memref<2x1x128xf32, #tpu.memory_space<vmem>>, %arg2: memref<128x128xbf16, #tpu.memory_space<vmem>>, %arg3: memref<1x128xf32, #tpu.memory_space<vmem>>, %arg4: memref<2x128xbf16, #tpu.memory_space<vmem>>) attributes {dimension_semantics = [#tpu.dimension_semantics<arbitrary>], iteration_bounds = array<i64: 1>, scalar_prefetch = 0 : i64, scratch_operands = 0 : i64, tpu.core_type = #tpu.core_type<tc>, window_params = [{pipeline_mode = #tpu.pipeline_mode<synchronous>, transform_indices = @transform_0, window_bounds = array<i64: 2, 1, 128>}, {pipeline_mode = #tpu.pipeline_mode<synchronous>, transform_indices = @transform_1, window_bounds = array<i64: 128, 128>}, {pipeline_mode = #tpu.pipeline_mode<synchronous>, transform_indices = @transform_2, window_bounds = array<i64: 1, 128>}, {pipeline_mode = #tpu.pipeline_mode<synchronous>, transform_indices = @transform_3, window_bounds = array<i64: 2, 128>}]} {
    %c0 = arith.constant 0 : index
    %c0_0 = arith.constant 0 : index
    %c0_1 = arith.constant 0 : index
    %0 = vector.load %arg1[%c0, %c0_0, %c0_1] : memref<2x1x128xf32, #tpu.memory_space<vmem>>, vector<2x1x128xf32>
    %1 = vector.shape_cast %0 : vector<2x1x128xf32> to vector<2x128xf32>
    %2 = arith.truncf %1 : vector<2x128xf32> to vector<2x128xbf16>
    %c0_2 = arith.constant 0 : index
    %c0_3 = arith.constant 0 : index
    %3 = vector.load %arg2[%c0_2, %c0_3] : memref<128x128xbf16, #tpu.memory_space<vmem>>, vector<128x128xbf16>
    %cst = arith.constant dense<0.000000e+00> : vector<2x128xf32>
    %4 = tpu.matmul %2, %3, %cst {dimension_numbers = #tpu.dot_dimension_numbers<[1], [0], [0], [1], [0, 0, 1, 1], [], []>} : vector<2x128xbf16>, vector<128x128xbf16>, vector<2x128xf32> -> vector<2x128xf32>
    %c0_4 = arith.constant 0 : index
    %c0_5 = arith.constant 0 : index
    %5 = vector.load %arg3[%c0_4, %c0_5] : memref<1x128xf32, #tpu.memory_space<vmem>>, vector<1x128xf32>
    %6 = vector.broadcast %5 : vector<1x128xf32> to vector<2x128xf32>
    %7 = arith.addf %4, %6 : vector<2x128xf32>
    %8 = arith.mulf %7, %7 : vector<2x128xf32>
    %cst_6 = arith.constant dense<0.000000e+00> : vector<2xf32>
    %9 = vector.multi_reduction <add>, %8, %cst_6 [1] : vector<2x128xf32> to vector<2xf32>
    %10 = vector.shape_cast %9 : vector<2xf32> to vector<2x1xf32>
    %11 = math.sqrt %10 : vector<2x1xf32>
    %cst_7 = arith.constant 9.99999996E-13 : f32
    %12 = vector.broadcast %cst_7 : f32 to vector<2x1xf32>
    %13 = arith.maximumf %11, %12 : vector<2x1xf32>
    %14 = vector.broadcast %13 : vector<2x1xf32> to vector<2x128xf32>
    %15 = arith.divf %7, %14 : vector<2x128xf32>
    %16 = arith.truncf %15 : vector<2x128xf32> to vector<2x128xbf16>
    %c0_8 = arith.constant 0 : index
    %c0_9 = arith.constant 0 : index
    %17 = vector.load %arg4[%c0_8, %c0_9] : memref<2x128xbf16, #tpu.memory_space<vmem>>, vector<2x128xbf16>
    tpu.vector_store %arg4[%c0_8, %c0_9], %16 {strides = array<i32>} : memref<2x128xbf16, #tpu.memory_space<vmem>>, vector<2x128xbf16>,
    return
  }
  func.func @transform_0(%arg0: i32) -> (i32, i32, i32) {
    %c0_i32 = arith.constant 0 : i32
    %c0_i32_0 = arith.constant 0 : i32
    %c0_i32_1 = arith.constant 0 : i32
    %c0_i32_2 = arith.constant 0 : i32
    return %c0_i32, %c0_i32_0, %c0_i32_1 : i32, i32, i32
  }
  func.func @transform_1(%arg0: i32) -> (i32, i32) {
    %c0_i32 = arith.constant 0 : i32
    %c0_i32_0 = arith.constant 0 : i32
    %c0_i32_1 = arith.constant 0 : i32
    return %c0_i32, %c0_i32_0 : i32, i32
  }
  func.func @transform_2(%arg0: i32) -> (i32, i32) {
    %c0_i32 = arith.constant 0 : i32
    %c0_i32_0 = arith.constant 0 : i32
    %c0_i32_1 = arith.constant 0 : i32
    return %c0_i32, %c0_i32_0 : i32, i32
  }
  func.func @transform_3(%arg0: i32) -> (i32, i32) {
    %c0_i32 = arith.constant 0 : i32
    %c0_i32_0 = arith.constant 0 : i32
    %c0_i32_1 = arith.constant 0 : i32
    return %c0_i32, %c0_i32_0 : i32, i32
  }
}

module attributes {stable_mosaic.version = 11 : i64} {
  func.func @_arcface_kernel(%arg0: i32, %arg1: memref<2x128xbf16, #tpu.memory_space<vmem>>, %arg2: memref<128x128xbf16, #tpu.memory_space<vmem>>, %arg3: memref<2x1xi32, #tpu.memory_space<vmem>>, %arg4: memref<2x128xf32, #tpu.memory_space<vmem>>) attributes {dimension_semantics = [#tpu.dimension_semantics<parallel>], iteration_bounds = array<i64: 1>, scalar_prefetch = 0 : i64, scratch_operands = 0 : i64, tpu.core_type = #tpu.core_type<tc>, window_params = [{pipeline_mode = #tpu.pipeline_mode<synchronous>, transform_indices = @transform_0, window_bounds = array<i64: 2, 128>}, {transform_indices = @transform_1, window_bounds = array<i64: 128, 128>}, {pipeline_mode = #tpu.pipeline_mode<synchronous>, transform_indices = @transform_2, window_bounds = array<i64: 2, 1>}, {transform_indices = @transform_3, window_bounds = array<i64: 2, 128>}]} {
    %c0 = arith.constant 0 : index
    %c0_0 = arith.constant 0 : index
    %0 = vector.load %arg1[%c0, %c0_0] : memref<2x128xbf16, #tpu.memory_space<vmem>>, vector<2x128xbf16>
    %c0_1 = arith.constant 0 : index
    %c0_2 = arith.constant 0 : index
    %1 = vector.load %arg2[%c0_1, %c0_2] : memref<128x128xbf16, #tpu.memory_space<vmem>>, vector<128x128xbf16>
    %cst = arith.constant dense<0.000000e+00> : vector<2x128xf32>
    %2 = tpu.matmul %0, %1, %cst {dimension_numbers = #tpu.dot_dimension_numbers<[1], [0], [0], [1], [0, 0, 1, 1], [], []>} : vector<2x128xbf16>, vector<128x128xbf16>, vector<2x128xf32> -> vector<2x128xf32>
    %cst_3 = arith.constant -1.000000e+00 : f32
    %cst_4 = arith.constant 1.000000e+00 : f32
    %3 = vector.broadcast %cst_3 : f32 to vector<2x128xf32>
    %4 = arith.maximumf %3, %2 : vector<2x128xf32>
    %5 = vector.broadcast %cst_4 : f32 to vector<2x128xf32>
    %6 = arith.minimumf %5, %4 : vector<2x128xf32>
    %7 = arith.mulf %6, %6 : vector<2x128xf32>
    %cst_5 = arith.constant 1.000000e+00 : f32
    %8 = vector.broadcast %cst_5 : f32 to vector<2x128xf32>
    %9 = arith.subf %8, %7 : vector<2x128xf32>
    %cst_6 = arith.constant 0.000000e+00 : f32
    %10 = vector.broadcast %cst_6 : f32 to vector<2x128xf32>
    %11 = arith.maximumf %9, %10 : vector<2x128xf32>
    %12 = math.sqrt %11 : vector<2x128xf32>
    %cst_7 = arith.constant 0.87758255 : f32
    %13 = vector.broadcast %cst_7 : f32 to vector<2x128xf32>
    %14 = arith.mulf %6, %13 : vector<2x128xf32>
    %cst_8 = arith.constant 0.47942555 : f32
    %15 = vector.broadcast %cst_8 : f32 to vector<2x128xf32>
    %16 = arith.mulf %12, %15 : vector<2x128xf32>
    %17 = arith.subf %14, %16 : vector<2x128xf32>
    %cst_9 = arith.constant -0.87758255 : f32
    %18 = vector.broadcast %cst_9 : f32 to vector<2x128xf32>
    %19 = arith.cmpf ogt, %6, %18 : vector<2x128xf32>
    %cst_10 = arith.constant 0.239712775 : f32
    %20 = vector.broadcast %cst_10 : f32 to vector<2x128xf32>
    %21 = arith.subf %6, %20 : vector<2x128xf32>
    %22 = arith.select %19, %17, %21 : vector<2x128xi1>, vector<2x128xf32>
    %c0_11 = arith.constant 0 : index
    %c0_12 = arith.constant 0 : index
    %23 = vector.load %arg3[%c0_11, %c0_12] : memref<2x1xi32, #tpu.memory_space<vmem>>, vector<2x1xi32>
    %c128_i32 = arith.constant 128 : i32
    %24 = arith.muli %arg0, %c128_i32 : i32
    %25 = tpu.iota {dimensions = array<i32: 1>} : vector<2x128xi32>
    %26 = vector.broadcast %24 : i32 to vector<2x128xi32>
    %27 = arith.addi %26, %25 : vector<2x128xi32>
    %28 = vector.broadcast %23 : vector<2x1xi32> to vector<2x128xi32>
    %29 = arith.cmpi eq, %27, %28 : vector<2x128xi32>
    %30 = arith.extui %29 : vector<2x128xi1> to vector<2x128xi32>
    %31 = arith.sitofp %30 : vector<2x128xi32> to vector<2x128xf32>
    %32 = arith.mulf %31, %22 : vector<2x128xf32>
    %cst_13 = arith.constant 1.000000e+00 : f32
    %33 = vector.broadcast %cst_13 : f32 to vector<2x128xf32>
    %34 = arith.subf %33, %31 : vector<2x128xf32>
    %35 = arith.mulf %34, %6 : vector<2x128xf32>
    %36 = arith.addf %32, %35 : vector<2x128xf32>
    %cst_14 = arith.constant 1.000000e+01 : f32
    %37 = vector.broadcast %cst_14 : f32 to vector<2x128xf32>
    %38 = arith.mulf %36, %37 : vector<2x128xf32>
    %c0_15 = arith.constant 0 : index
    %c0_16 = arith.constant 0 : index
    %39 = vector.load %arg4[%c0_15, %c0_16] : memref<2x128xf32, #tpu.memory_space<vmem>>, vector<2x128xf32>
    tpu.vector_store %arg4[%c0_15, %c0_16], %38 {strides = array<i32>} : memref<2x128xf32, #tpu.memory_space<vmem>>, vector<2x128xf32>,
    return
  }
  func.func @transform_0(%arg0: i32) -> (i32, i32) {
    %c0_i32 = arith.constant 0 : i32
    %c0_i32_0 = arith.constant 0 : i32
    %c0_i32_1 = arith.constant 0 : i32
    return %c0_i32, %c0_i32_0 : i32, i32
  }
  func.func @transform_1(%arg0: i32) -> (i32, i32) {
    %c0_i32 = arith.constant 0 : i32
    %c0_i32_0 = arith.constant 0 : i32
    return %c0_i32, %arg0 : i32, i32
  }
  func.func @transform_2(%arg0: i32) -> (i32, i32) {
    %c0_i32 = arith.constant 0 : i32
    %c0_i32_0 = arith.constant 0 : i32
    %c0_i32_1 = arith.constant 0 : i32
    return %c0_i32, %c0_i32_0 : i32, i32
  }
  func.func @transform_3(%arg0: i32) -> (i32, i32) {
    %c0_i32 = arith.constant 0 : i32
    %c0_i32_0 = arith.constant 0 : i32
    return %c0_i32, %arg0 : i32, i32
  }
}

</mosaic_0001>

<llo_original>
// kernel: efficientnet_arcface_forward.4
$region0: #{efficientnet_arcface_forward.4}
  #allocation0 [shape = 'u32[]', space=smem, size = 0x4, offset = 0x4, fixed_abs, tag = 'smem constant byte address 0x4 - core index']
  #allocation1 [shape = 'u32[144,128]{1,0:T(1,128)}', space=vmem, size = 0x12000, scoped, tag = 'internal scratch']
  %s0 = inlined_call_operand.vmem [shape: f32[2,1,128], index: 0, kind: input, shape index: {}]
  %s1 = inlined_call_operand.vmem [shape: bf16[128,128], index: 1, kind: input, shape index: {}]
  %s2 = inlined_call_operand.vmem [shape: f32[1,128], index: 2, kind: input, shape index: {}]
  %s3 = inlined_call_operand.vmem [shape: bf16[2,128], index: 3, kind: output, shape index: {}]
  %s4 = sld [smem:[#allocation0]]
  $region22: #{efficientnet_arcface_forward.4} parent=0
    _
  %s6 = ssub.s32 1, %s4
  %s7 = scalar_select 0, %s6, %s4
  // Predicated region
  $region2: #{efficientnet_arcface_forward.4} parent=0 // pred_check
    _
  $region3: #{efficientnet_arcface_forward.4} parent=0 // pred_check_branch
    %9 = sbr.rel (0) target = $region5
  $region4: #{efficientnet_arcface_forward.4} parent=0 // pred_region
    _
  $region5: #{efficientnet_arcface_forward.4} parent=0 // pred_fallthru
    _
  // Predicated region
  $region6: #{efficientnet_arcface_forward.4} parent=0 // pred_check
    _
  $region7: #{efficientnet_arcface_forward.4} parent=0 // pred_check_branch
    %11 = sbr.rel (0) target = $region9
  $region8: #{efficientnet_arcface_forward.4} parent=0 // pred_region
    _
  $region9: #{efficientnet_arcface_forward.4} parent=0 // pred_fallthru
    _
  // Predicated region
  $region10: #{efficientnet_arcface_forward.4} parent=0 // pred_check
    _
  $region11: #{efficientnet_arcface_forward.4} parent=0 // pred_check_branch
    %13 = sbr.rel (0) target = $region13
  $region12: #{efficientnet_arcface_forward.4} parent=0 // pred_region
    _
  $region13: #{efficientnet_arcface_forward.4} parent=0 // pred_fallthru
    _
  %v15 = vld [vmem:[%s0] sm:$0x1]
  %v16 = vld [vmem:[%s0 + $0x1] sm:$0x1]
  %v17 = vpack.c.bf16 %v15, %v15
  %v18 = vpack.c.bf16 %v16, %v16
  %v19 = vld [vmem:[%s1] sm:$0xf]
  %v20 = vld [vmem:[%s1 + $0x4] sm:$0xf]
  %v21 = vld [vmem:[%s1 + $0x8] sm:$0xf]
  %v22 = vld [vmem:[%s1 + $0xc] sm:$0xf]
  %v23 = vld [vmem:[%s1 + $0x10] sm:$0xf]
  %v24 = vld [vmem:[%s1 + $0x14] sm:$0xf]
  %v25 = vld [vmem:[%s1 + $0x18] sm:$0xf]
  %v26 = vld [vmem:[%s1 + $0x1c] sm:$0xf]
  %v27 = vld [vmem:[%s1 + $0x20] sm:$0xf]
  %v28 = vld [vmem:[%s1 + $0x24] sm:$0xf]
  %v29 = vld [vmem:[%s1 + $0x28] sm:$0xf]
  %v30 = vld [vmem:[%s1 + $0x2c] sm:$0xf]
  %v31 = vld [vmem:[%s1 + $0x30] sm:$0xf]
  %v32 = vld [vmem:[%s1 + $0x34] sm:$0xf]
  %v33 = vld [vmem:[%s1 + $0x38] sm:$0xf]
  %v34 = vld [vmem:[%s1 + $0x3c] sm:$0xf]
  %v35 = vld [vmem:[%s2] sm:$0x1]
  %v37 = vlaneseq
  %v38 = vshrl.u32 %v37, 7
  %v39 = vsub.s32 0, %v38
  %v40 = vrot.slane %v35, %v39
  %v44 = vunpack.c.l.b16 %v17
  %v45 = vunpack.c.l.b16 %v18
  %v46 = vrot.slane %v45, 7
  %vm47 = vcmask 1041409
  %v48 = vsel %vm47, %v46, %v44
  %v49 = vpack.c.b16 %v48, %v48
  %v67 = vunpack.c.l.b16 %v19
  %v68 = vunpack.c.l.b16 %v20
  %v69 = vunpack.c.l.b16 %v21
  %v70 = vunpack.c.l.b16 %v22
  %v71 = vunpack.c.l.b16 %v23
  %v72 = vunpack.c.l.b16 %v24
  %v73 = vunpack.c.l.b16 %v25
  %v74 = vunpack.c.l.b16 %v26
  %v75 = vunpack.c.l.b16 %v27
  %v76 = vunpack.c.l.b16 %v28
  %v77 = vunpack.c.l.b16 %v29
  %v78 = vunpack.c.l.b16 %v30
  %v79 = vunpack.c.l.b16 %v31
  %v80 = vunpack.c.l.b16 %v32
  %v81 = vunpack.c.l.b16 %v33
  %v82 = vunpack.c.l.b16 %v34
  %v83 = vpack.c.b16 %v68, %v67
  %v84 = vpack.c.b16 %v70, %v69
  %v85 = vpack.c.b16 %v72, %v71
  %v86 = vpack.c.b16 %v74, %v73
  %v87 = vpack.c.b16 %v76, %v75
  %v88 = vpack.c.b16 %v78, %v77
  %v89 = vpack.c.b16 %v80, %v79
  %v90 = vpack.c.b16 %v82, %v81
  %99 = vmatprep.subr.bf16.mxu0 0
  %100 = vmatpush1.bf16.msra.mxu0 %v83
  %101 = vmatprep.subr.bf16.mxu0 0
  %102 = vmatpush1.bf16.msra.mxu0 %v84
  %103 = vmatprep.subr.bf16.mxu0 0
  %104 = vmatpush1.bf16.msra.mxu0 %v85
  %105 = vmatprep.subr.bf16.mxu0 0
  %106 = vmatpush1.bf16.msra.mxu0 %v86
  %107 = vmatprep.subr.bf16.mxu0 0
  %108 = vmatpush1.bf16.msra.mxu0 %v87
  %109 = vmatprep.subr.bf16.mxu0 0
  %110 = vmatpush1.bf16.msra.mxu0 %v88
  %111 = vmatprep.subr.bf16.mxu0 0
  %112 = vmatpush1.bf16.msra.mxu0 %v89
  %113 = vmatprep.subr.bf16.mxu0 0
  %114 = vmatpush1.bf16.msra.mxu0 %v90
  %115 = vmatprep.subr.bf16.mxu0 0
  %116 = vmatpush1.bf16.msra.mxu0 0
  %117 = vmatprep.subr.bf16.mxu0 0
  %118 = vmatpush1.bf16.msra.mxu0 0
  %119 = vmatprep.subr.bf16.mxu0 0
  %120 = vmatpush1.bf16.msra.mxu0 0
  %121 = vmatprep.subr.bf16.mxu0 0
  %122 = vmatpush1.bf16.msra.mxu0 0
  %123 = vmatprep.subr.bf16.mxu0 0
  %124 = vmatpush1.bf16.msra.mxu0 0
  %125 = vmatprep.subr.bf16.mxu0 0
  %126 = vmatpush1.bf16.msra.mxu0 0
  %127 = vmatprep.subr.bf16.mxu0 0
  %128 = vmatpush1.bf16.msra.mxu0 0
  %129 = vmatprep.subr.bf16.mxu0 0
  %130 = vmatpush1.bf16.msra.mxu0 0
  %131 = vmatprep.mubr.bf16.mxu0 0
  %132 = vmatmul.mubr.bf16.gmra.mrb[0].mxu0 %v49
  %v133 = vpop.f32.mrb[0].mxu0
  %v134 = vadd.f32 %v40, %v133
  %v135 = vpop.f32.mrb[0].mxu0
  %v136 = vpop.f32.mrb[0].mxu0
  %v137 = vpop.f32.mrb[0].mxu0
  %138 = vdwg.mxu0
  %v139 = vmul.f32 %v134, %v134
  %vm140 = vcmask 1041408
  %v141 = vsel %vm140, %v139, 0.0
  %142 = vadd.xlane.f32.xlu0 %v141
  %v143 = vpop.xlane.xlu0 %142
  %v144 = vrsqrt.pop %v143
  %v145 = vmul.f32 %v143, %v144
  %vm146 = vcmp.eq.f32.partialorder %v143, inf
  %v147 = vsel %vm146, %v143, %v145
  %vm148 = vcmp.eq.f32.partialorder %v143, 0.0
  %v149 = vand.u32 %v143, 2147483648
  %v150 = vsel %vm148, %v149, %v147
  %v151 = vmax.f32 %v150, 1e-12
  %v152 = vrcp.pop %v151
  %v153 = vmul.f32 %v134, %v152
  %v154 = vpack.c.bf16 %v153, %v153
  %155 = vst [vmem:[%s3] sm:$0x1] %v154
  // Predicated region
  $region14: #{efficientnet_arcface_forward.4} parent=0 // pred_check
    _
  $region15: #{efficientnet_arcface_forward.4} parent=0 // pred_check_branch
    %157 = sbr.rel (0) target = $region17
  $region16: #{efficientnet_arcface_forward.4} parent=0 // pred_region
    _
  $region17: #{efficientnet_arcface_forward.4} parent=0 // pred_fallthru
    _
  // Predicated region
  $region18: #{efficientnet_arcface_forward.4} parent=0 // pred_check
    _
  $region19: #{efficientnet_arcface_forward.4} parent=0 // pred_check_branch
    %159 = sbr.rel (0) target = $region21
  $region20: #{efficientnet_arcface_forward.4} parent=0 // pred_region
    _
  $region21: #{efficientnet_arcface_forward.4} parent=0 // pred_fallthru
    _

// kernel: efficientnet_arcface_forward.3
$region0: #{efficientnet_arcface_forward.3}
  #allocation0 [shape = 'u32[]', space=smem, size = 0x4, offset = 0x4, fixed_abs, tag = 'smem constant byte address 0x4 - core index']
  #allocation1 [shape = 'u32[144,128]{1,0:T(1,128)}', space=vmem, size = 0x12000, scoped, tag = 'internal scratch']
  %s0 = inlined_call_operand.vmem [shape: bf16[2,256,128], index: 0, kind: input, shape index: {}]
  %s1 = inlined_call_operand.vmem [shape: bf16[128,128], index: 1, kind: input, shape index: {}]
  %s2 = inlined_call_operand.vmem [shape: f32[1,128], index: 2, kind: input, shape index: {}]
  %s3 = inlined_call_operand.vmem [shape: f32[2,1,128], index: 3, kind: output, shape index: {}]
  %s4 = sld [smem:[#allocation0]]
  $region53: #{efficientnet_arcface_forward.3} parent=0
    _
  %s6 = ssub.s32 1, %s4
  %s7 = scalar_select 0, %s6, %s4
  loop: start=0, step=1, limit=4
  $region2: #{efficientnet_arcface_forward.3} parent=0 // loop_pre_header
    _
  $region3: #{efficientnet_arcface_forward.3} parent=0 // loop_header
    %s9 = sphi 0, %s13
    %p10 = scmp.ge.s32.totalorder %s9, 4
    %s16 = sphi 0, %s28
    %s17 = sphi 0, %s24
    %s18 = sphi 0, %s16
    %s19 = sphi 0, %s17
    %s20 = sphi 0, %s18
    %s21 = sphi 0, %s19
    %s33 = sphi 0, %s35
    %s36 = sphi 0, %s33
    %s37 = sphi 0, %s36
    %s53 = sphi 0, %s37
    %s57 = sphi 0, %s57
    %s59 = sphi 0, %s57
    %s60 = sphi 0, %s59
    %s74 = sphi 0, %s60
    %s78 = sphi 0, %s78
    %s80 = sphi 0, %s78
    %s81 = sphi 0, %s80
    %s95 = sphi 0, %s81
    %s101 = sphi 0, %s103
    %s104 = sphi 0, %s101
    %s105 = sphi 0, %s104
    %s121 = sphi 0, %s105
  $region4: #{efficientnet_arcface_forward.3} parent=0 // loop_header_branch
    %12 = sbr.rel (%p10) target = $region8
  $region5: #{efficientnet_arcface_forward.3} parent=0 // loop_body
    %s14 = ssub.s32 %s9, 1
    %s15 = ssub.s32 %s9, 2
    %s22 = sadd.s32 1, %s17
    %p23 = scmp.ge.s32.totalorder %s22, 1
    %s24 = scalar_select %p23, 0, %s22
    %s25 = sadd.s32 1, %s16
    %s26 = scalar_select %p23, %s25, %s16
    %p27 = scmp.ge.s32.totalorder %s26, 2
    %s28 = scalar_select %p27, 0, %s26
    %s29 = ssub.s32 %s16, %s28
    %s30 = ssub.s32 %s17, %s24
    %s31 = sor.u32 %s29, %s30
    %p32 = scmp.eq.s32.totalorder %s31, 0
    %s34 = sadd.s32 %s33, 1
    %s35 = scalar_select %p32, %s33, %s34
    %p38 = pneg %p32
    %p39 = scmp.eq.s32.totalorder %s9, 1
    %p40 = por %p38, %p39
    %p41 = scmp.ne.s32.totalorder %s33, %s36
    %p42 = scmp.eq.s32.totalorder %s9, 0
    %p43 = por %p41, %p42
    %p44 = scmp.ne.s32.totalorder %s33, %s36
    %p45 = scmp.eq.s32.totalorder %s14, 1
    %p46 = por %p44, %p45
    %p47 = scmp.ne.s32.totalorder %s36, %s37
    %p48 = scmp.eq.s32.totalorder %s14, 0
    %p49 = por %p47, %p48
    %p50 = scmp.ne.s32.totalorder %s36, %s37
    %p51 = scmp.eq.s32.totalorder %s15, 1
    %p52 = por %p50, %p51
    %p54 = scmp.ne.s32.totalorder %s37, %s53
    %p55 = scmp.eq.s32.totalorder %s15, 0
    %p56 = por %p54, %p55
    %s58 = sadd.s32 %s57, 1
    %p61 = scmp.eq.s32.totalorder %s9, 1
    %p62 = scmp.ne.s32.totalorder %s57, %s59
    %p63 = scmp.eq.s32.totalorder %s9, 0
    %p64 = por %p62, %p63
    %p65 = scmp.ne.s32.totalorder %s57, %s59
    %p66 = scmp.eq.s32.totalorder %s14, 1
    %p67 = por %p65, %p66
    %p68 = scmp.ne.s32.totalorder %s59, %s60
    %p69 = scmp.eq.s32.totalorder %s14, 0
    %p70 = por %p68, %p69
    %p71 = scmp.ne.s32.totalorder %s59, %s60
    %p72 = scmp.eq.s32.totalorder %s15, 1
    %p73 = por %p71, %p72
    %p75 = scmp.ne.s32.totalorder %s60, %s74
    %p76 = scmp.eq.s32.totalorder %s15, 0
    %p77 = por %p75, %p76
    %s79 = sadd.s32 %s78, 1
    %p82 = scmp.eq.s32.totalorder %s9, 1
    %p83 = scmp.ne.s32.totalorder %s78, %s80
    %p84 = scmp.eq.s32.totalorder %s9, 0
    %p85 = por %p83, %p84
    %p86 = scmp.ne.s32.totalorder %s78, %s80
    %p87 = scmp.eq.s32.totalorder %s14, 1
    %p88 = por %p86, %p87
    %p89 = scmp.ne.s32.totalorder %s80, %s81
    %p90 = scmp.eq.s32.totalorder %s14, 0
    %p91 = por %p89, %p90
    %p92 = scmp.ne.s32.totalorder %s80, %s81
    %p93 = scmp.eq.s32.totalorder %s15, 1
    %p94 = por %p92, %p93
    %p96 = scmp.ne.s32.totalorder %s81, %s95
    %p97 = scmp.eq.s32.totalorder %s15, 0
    %p98 = por %p96, %p97
    %s99 = ssub.s32 %s16, %s28
    %p100 = scmp.eq.s32.totalorder %s99, 0
    %s102 = sadd.s32 %s101, 1
    %s103 = scalar_select %p100, %s101, %s102
    %p106 = pneg %p100
    %p107 = scmp.eq.s32.totalorder %s9, 1
    %p108 = por %p106, %p107
    %p109 = scmp.ne.s32.totalorder %s101, %s104
    %p110 = scmp.eq.s32.totalorder %s9, 0
    %p111 = por %p109, %p110
    %p112 = scmp.ne.s32.totalorder %s101, %s104
    %p113 = scmp.eq.s32.totalorder %s14, 1
    %p114 = por %p112, %p113
    %p115 = scmp.ne.s32.totalorder %s104, %s105
    %p116 = scmp.eq.s32.totalorder %s14, 0
    %p117 = por %p115, %p116
    %p118 = scmp.ne.s32.totalorder %s104, %s105
    %p119 = scmp.eq.s32.totalorder %s15, 1
    %p120 = por %p118, %p119
    %p122 = scmp.ne.s32.totalorder %s105, %s121
    %p123 = scmp.eq.s32.totalorder %s15, 0
    %p124 = por %p122, %p123
    %p125 = scmp.le.s32.totalorder 1, %s9
    %p126 = scmp.lt.s32.totalorder %s9, 3
    %p127 = pnand %p125, %p126
    %p128 = pneg %p127
    // Predicated region
    $region9: #{efficientnet_arcface_forward.3} parent=5 // pred_check
      _
    $region10: #{efficientnet_arcface_forward.3} parent=5 // pred_check_branch
      %130 = sbr.rel (%p127) target = $region12
    $region11: #{efficientnet_arcface_forward.3} parent=5 // pred_region
      %s131 = ssub.s32 %s9, 1
      // Predicated region
      $region13: #{efficientnet_arcface_forward.3} parent=11 // pred_check
        %p132 = pneg %p70
      $region14: #{efficientnet_arcface_forward.3} parent=11 // pred_check_branch
        %134 = sbr.rel (%p132) target = $region16
      $region15: #{efficientnet_arcface_forward.3} parent=11 // pred_region
        _
      $region16: #{efficientnet_arcface_forward.3} parent=11 // pred_fallthru
        _
      // Predicated region
      $region17: #{efficientnet_arcface_forward.3} parent=11 // pred_check
        %p135 = pneg %p91
      $region18: #{efficientnet_arcface_forward.3} parent=11 // pred_check_branch
        %137 = sbr.rel (%p135) target = $region20
      $region19: #{efficientnet_arcface_forward.3} parent=11 // pred_region
        _
      $region20: #{efficientnet_arcface_forward.3} parent=11 // pred_fallthru
        _
    $region12: #{efficientnet_arcface_forward.3} parent=5 // pred_fallthru
      _
    %p138 = scmp.lt.s32.totalorder %s9, 2
    // Predicated region
    $region21: #{efficientnet_arcface_forward.3} parent=5 // pred_check
      %p139 = pneg %p138
    $region22: #{efficientnet_arcface_forward.3} parent=5 // pred_check_branch
      %141 = sbr.rel (%p139) target = $region24
    $region23: #{efficientnet_arcface_forward.3} parent=5 // pred_region
      // Predicated region
      $region25: #{efficientnet_arcface_forward.3} parent=23 // pred_check
        %p142 = pneg %p43
      $region26: #{efficientnet_arcface_forward.3} parent=23 // pred_check_branch
        %144 = sbr.rel (%p142) target = $region28
      $region27: #{efficientnet_arcface_forward.3} parent=23 // pred_region
        %s145 = smul.u32 32, %s17
        %p146 = scmp.lt.s32.totalorder %s16, 1
        %s147 = scalar_select %p146, %s16, 1
        %p148 = scmp.lt.s32.totalorder %s145, 31
        %s149 = scalar_select %p148, %s145, 31
        %s150 = smul.addr %s147, 32
        %s151 = sadd.s32 %s149, %s150
        %s152 = smul.addr %s151, 4
        %s153 = scalar_lea.vmem %s0, %s152
        %s154 = smul.u32 32, %s17
      $region28: #{efficientnet_arcface_forward.3} parent=23 // pred_fallthru
        _
    $region24: #{efficientnet_arcface_forward.3} parent=5 // pred_fallthru
      _
    %p155 = scmp.le.s32.totalorder 1, %s9
    %p156 = scmp.lt.s32.totalorder %s9, 3
    %p157 = pnand %p155, %p156
    %p158 = pneg %p157
    // Predicated region
    $region29: #{efficientnet_arcface_forward.3} parent=5 // pred_check
      _
    $region30: #{efficientnet_arcface_forward.3} parent=5 // pred_check_branch
      %160 = sbr.rel (%p157) target = $region32
    $region31: #{efficientnet_arcface_forward.3} parent=5 // pred_region
      %s161 = ssub.s32 %s9, 1
      %s162 = smul.u32 32, %s19
      %p163 = scmp.lt.s32.totalorder %s18, 1
      %s164 = scalar_select %p163, %s18, 1
      %p165 = scmp.lt.s32.totalorder %s162, 31
      %s166 = scalar_select %p165, %s162, 31
      %s167 = smul.addr %s164, 32
      %s168 = sadd.s32 %s166, %s167
      %s169 = smul.addr %s168, 4
      %s170 = scalar_lea.vmem %s0, %s169
      %p171 = pneg %p49
      %p172 = pneg %p46
      %p173 = pneg %p70
      %p174 = pneg %p67
      %p175 = pneg %p91
      %p176 = pneg %p88
      %p177 = pneg %p117
      %p178 = pneg %p114
      %p179 = scmp.lt.s32.totalorder %s18, 1
      %s180 = scalar_select %p179, %s18, 1
      %s181 = scalar_lea.vmem %s3, %s180
      %s182 = smul.u32 32, %s19
      %p183 = scmp.lt.s32.totalorder %s18, 1
      %s184 = scalar_select %p183, %s18, 1
      %p185 = scmp.lt.s32.totalorder %s182, 31
      %s186 = scalar_select %p185, %s182, 31
      %s187 = smul.addr %s184, 32
      %s188 = sadd.s32 %s186, %s187
      %s189 = smul.addr %s188, 4
      %s190 = scalar_lea.vmem %s0, %s189
      %s191 = smul.u32 32, %s19
      %p192 = scmp.lt.s32.totalorder %s18, 1
      %s193 = scalar_select %p192, %s18, 1
      %s194 = scalar_lea.vmem %s3, %s193
      %p196 = scmp.eq.s32.totalorder %s19, 0
      // Predicated region
      $region33: #{efficientnet_arcface_forward.3} parent=31 // pred_check
        %p197 = pneg %p196
      $region34: #{efficientnet_arcface_forward.3} parent=31 // pred_check_branch
        %199 = sbr.rel (%p197) target = $region36
      $region35: #{efficientnet_arcface_forward.3} parent=31 // pred_region
        %200 = vst [vmem:[%s194] sm:$0x1] 0.0
      $region36: #{efficientnet_arcface_forward.3} parent=31 // pred_fallthru
        _
      %v201 = vld [vmem:[%s190] sm:$0xf]
      %v202 = vld [vmem:[%s190 + $0x4] sm:$0xf]
      %v203 = vld [vmem:[%s190 + $0x8] sm:$0xf]
      %v204 = vld [vmem:[%s190 + $0xc] sm:$0xf]
      %v205 = vld [vmem:[%s190 + $0x10] sm:$0xf]
      %v206 = vld [vmem:[%s190 + $0x14] sm:$0xf]
      %v207 = vld [vmem:[%s190 + $0x18] sm:$0xf]
      %v208 = vld [vmem:[%s190 + $0x1c] sm:$0xf]
      %v209 = vld [vmem:[%s190 + $0x20] sm:$0xf]
      %v210 = vld [vmem:[%s190 + $0x24] sm:$0xf]
      %v211 = vld [vmem:[%s190 + $0x28] sm:$0xf]
      %v212 = vld [vmem:[%s190 + $0x2c] sm:$0xf]
      %v213 = vld [vmem:[%s190 + $0x30] sm:$0xf]
      %v214 = vld [vmem:[%s190 + $0x34] sm:$0xf]
      %v215 = vld [vmem:[%s190 + $0x38] sm:$0xf]
      %v216 = vld [vmem:[%s190 + $0x3c] sm:$0xf]
      %v217 = vld [vmem:[%s190 + $0x40] sm:$0xf]
      %v218 = vld [vmem:[%s190 + $0x44] sm:$0xf]
      %v219 = vld [vmem:[%s190 + $0x48] sm:$0xf]
      %v220 = vld [vmem:[%s190 + $0x4c] sm:$0xf]
      %v221 = vld [vmem:[%s190 + $0x50] sm:$0xf]
      %v222 = vld [vmem:[%s190 + $0x54] sm:$0xf]
      %v223 = vld [vmem:[%s190 + $0x58] sm:$0xf]
      %v224 = vld [vmem:[%s190 + $0x5c] sm:$0xf]
      %v225 = vld [vmem:[%s190 + $0x60] sm:$0xf]
      %v226 = vld [vmem:[%s190 + $0x64] sm:$0xf]
      %v227 = vld [vmem:[%s190 + $0x68] sm:$0xf]
      %v228 = vld [vmem:[%s190 + $0x6c] sm:$0xf]
      %v229 = vld [vmem:[%s190 + $0x70] sm:$0xf]
      %v230 = vld [vmem:[%s190 + $0x74] sm:$0xf]
      %v231 = vld [vmem:[%s190 + $0x78] sm:$0xf]
      %v232 = vld [vmem:[%s190 + $0x7c] sm:$0xf]
      %v233 = vld [vmem:[%s1] sm:$0xf]
      %v234 = vld [vmem:[%s1 + $0x4] sm:$0xf]
      %v235 = vld [vmem:[%s1 + $0x8] sm:$0xf]
      %v236 = vld [vmem:[%s1 + $0xc] sm:$0xf]
      %v237 = vld [vmem:[%s1 + $0x10] sm:$0xf]
      %v238 = vld [vmem:[%s1 + $0x14] sm:$0xf]
      %v239 = vld [vmem:[%s1 + $0x18] sm:$0xf]
      %v240 = vld [vmem:[%s1 + $0x1c] sm:$0xf]
      %v241 = vld [vmem:[%s1 + $0x20] sm:$0xf]
      %v242 = vld [vmem:[%s1 + $0x24] sm:$0xf]
      %v243 = vld [vmem:[%s1 + $0x28] sm:$0xf]
      %v244 = vld [vmem:[%s1 + $0x2c] sm:$0xf]
      %v245 = vld [vmem:[%s1 + $0x30] sm:$0xf]
      %v246 = vld [vmem:[%s1 + $0x34] sm:$0xf]
      %v247 = vld [vmem:[%s1 + $0x38] sm:$0xf]
      %v248 = vld [vmem:[%s1 + $0x3c] sm:$0xf]
      %v249 = vld [vmem:[%s2] sm:$0x1]
      %v251 = vlaneseq
      %v252 = vshrl.u32 %v251, 7
      %v253 = vsub.s32 0, %v252
      %v254 = vrot.slane %v249, %v253
      %v288 = vunpack.c.l.b16 %v201
      %v289 = vunpack.c.l.b16 %v202
      %v290 = vunpack.c.l.b16 %v203
      %v291 = vunpack.c.l.b16 %v204
      %v292 = vunpack.c.l.b16 %v205
      %v293 = vunpack.c.l.b16 %v206
      %v294 = vunpack.c.l.b16 %v207
      %v295 = vunpack.c.l.b16 %v208
      %v296 = vunpack.c.l.b16 %v209
      %v297 = vunpack.c.l.b16 %v210
      %v298 = vunpack.c.l.b16 %v211
      %v299 = vunpack.c.l.b16 %v212
      %v300 = vunpack.c.l.b16 %v213
      %v301 = vunpack.c.l.b16 %v214
      %v302 = vunpack.c.l.b16 %v215
      %v303 = vunpack.c.l.b16 %v216
      %v304 = vunpack.c.l.b16 %v217
      %v305 = vunpack.c.l.b16 %v218
      %v306 = vunpack.c.l.b16 %v219
      %v307 = vunpack.c.l.b16 %v220
      %v308 = vunpack.c.l.b16 %v221
      %v309 = vunpack.c.l.b16 %v222
      %v310 = vunpack.c.l.b16 %v223
      %v311 = vunpack.c.l.b16 %v224
      %v312 = vunpack.c.l.b16 %v225
      %v313 = vunpack.c.l.b16 %v226
      %v314 = vunpack.c.l.b16 %v227
      %v315 = vunpack.c.l.b16 %v228
      %v316 = vunpack.c.l.b16 %v229
      %v317 = vunpack.c.l.b16 %v230
      %v318 = vunpack.c.l.b16 %v231
      %v319 = vunpack.c.l.b16 %v232
      %v320 = vpack.c.b16 %v289, %v288
      %v321 = vpack.c.b16 %v291, %v290
      %v322 = vpack.c.b16 %v293, %v292
      %v323 = vpack.c.b16 %v295, %v294
      %v324 = vpack.c.b16 %v297, %v296
      %v325 = vpack.c.b16 %v299, %v298
      %v326 = vpack.c.b16 %v301, %v300
      %v327 = vpack.c.b16 %v303, %v302
      %v328 = vpack.c.b16 %v305, %v304
      %v329 = vpack.c.b16 %v307, %v306
      %v330 = vpack.c.b16 %v309, %v308
      %v331 = vpack.c.b16 %v311, %v310
      %v332 = vpack.c.b16 %v313, %v312
      %v333 = vpack.c.b16 %v315, %v314
      %v334 = vpack.c.b16 %v317, %v316
      %v335 = vpack.c.b16 %v319, %v318
      %v368 = vunpack.c.l.b16 %v233
      %v369 = vunpack.c.l.b16 %v234
      %v370 = vunpack.c.l.b16 %v235
      %v371 = vunpack.c.l.b16 %v236
      %v372 = vunpack.c.l.b16 %v237
      %v373 = vunpack.c.l.b16 %v238
      %v374 = vunpack.c.l.b16 %v239
      %v375 = vunpack.c.l.b16 %v240
      %v376 = vunpack.c.l.b16 %v241
      %v377 = vunpack.c.l.b16 %v242
      %v378 = vunpack.c.l.b16 %v243
      %v379 = vunpack.c.l.b16 %v244
      %v380 = vunpack.c.l.b16 %v245
      %v381 = vunpack.c.l.b16 %v246
      %v382 = vunpack.c.l.b16 %v247
      %v383 = vunpack.c.l.b16 %v248
      %v384 = vpack.c.b16 %v369, %v368
      %v385 = vpack.c.b16 %v371, %v370
      %v386 = vpack.c.b16 %v373, %v372
      %v387 = vpack.c.b16 %v375, %v374
      %v388 = vpack.c.b16 %v377, %v376
      %v389 = vpack.c.b16 %v379, %v378
      %v390 = vpack.c.b16 %v381, %v380
      %v391 = vpack.c.b16 %v383, %v382
      %400 = vmatprep.subr.bf16.mxu0 0
      %401 = vmatpush1.bf16.msra.mxu0 %v384
      %402 = vmatprep.subr.bf16.mxu0 0
      %403 = vmatpush1.bf16.msra.mxu0 %v385
      %404 = vmatprep.subr.bf16.mxu0 0
      %405 = vmatpush1.bf16.msra.mxu0 %v386
      %406 = vmatprep.subr.bf16.mxu0 0
      %407 = vmatpush1.bf16.msra.mxu0 %v387
      %408 = vmatprep.subr.bf16.mxu0 0
      %409 = vmatpush1.bf16.msra.mxu0 %v388
      %410 = vmatprep.subr.bf16.mxu0 0
      %411 = vmatpush1.bf16.msra.mxu0 %v389
      %412 = vmatprep.subr.bf16.mxu0 0
      %413 = vmatpush1.bf16.msra.mxu0 %v390
      %414 = vmatprep.subr.bf16.mxu0 0
      %415 = vmatpush1.bf16.msra.mxu0 %v391
      %416 = vmatprep.subr.bf16.mxu0 0
      %417 = vmatpush1.bf16.msra.mxu0 0
      %418 = vmatprep.subr.bf16.mxu0 0
      %419 = vmatpush1.bf16.msra.mxu0 0
      %420 = vmatprep.subr.bf16.mxu0 0
      %421 = vmatpush1.bf16.msra.mxu0 0
      %422 = vmatprep.subr.bf16.mxu0 0
      %423 = vmatpush1.bf16.msra.mxu0 0
      %424 = vmatprep.subr.bf16.mxu0 0
      %425 = vmatpush1.bf16.msra.mxu0 0
      %426 = vmatprep.subr.bf16.mxu0 0
      %427 = vmatpush1.bf16.msra.mxu0 0
      %428 = vmatprep.subr.bf16.mxu0 0
      %429 = vmatpush1.bf16.msra.mxu0 0
      %430 = vmatprep.subr.bf16.mxu0 0
      %431 = vmatpush1.bf16.msra.mxu0 0
      %432 = vmatprep.mubr.bf16.mxu0 0
      %433 = vmatmul.mubr.bf16.gmra.mrb[0].mxu0 %v320
      %v434 = vpop.f32.mrb[0].mxu0
      %v435 = vadd.f32 %v254, %v434
      %v436 = vpop.f32.mrb[0].mxu0
      %v437 = vpop.f32.mrb[0].mxu0
      %v438 = vadd.f32 %v254, %v437
      %v439 = vpop.f32.mrb[0].mxu0
      %440 = vmatprep.mubr.bf16.mxu0 0
      %441 = vmatmul.mubr.bf16.gmra.mrb[0].mxu0 %v321
      %v442 = vpop.f32.mrb[0].mxu0
      %v443 = vadd.f32 %v254, %v442
      %v444 = vpop.f32.mrb[0].mxu0
      %v445 = vpop.f32.mrb[0].mxu0
      %v446 = vadd.f32 %v254, %v445
      %v447 = vpop.f32.mrb[0].mxu0
      %448 = vmatprep.mubr.bf16.mxu0 0
      %449 = vmatmul.mubr.bf16.gmra.mrb[0].mxu0 %v322
      %v450 = vpop.f32.mrb[0].mxu0
      %v451 = vadd.f32 %v254, %v450
      %v452 = vpop.f32.mrb[0].mxu0
      %v453 = vpop.f32.mrb[0].mxu0
      %v454 = vadd.f32 %v254, %v453
      %v455 = vpop.f32.mrb[0].mxu0
      %456 = vmatprep.mubr.bf16.mxu0 0
      %457 = vmatmul.mubr.bf16.gmra.mrb[0].mxu0 %v323
      %v458 = vpop.f32.mrb[0].mxu0
      %v459 = vadd.f32 %v254, %v458
      %v460 = vpop.f32.mrb[0].mxu0
      %v461 = vpop.f32.mrb[0].mxu0
      %v462 = vadd.f32 %v254, %v461
      %v463 = vpop.f32.mrb[0].mxu0
      %464 = vmatprep.mubr.bf16.mxu0 0
      %465 = vmatmul.mubr.bf16.gmra.mrb[0].mxu0 %v324
      %v466 = vpop.f32.mrb[0].mxu0
      %v467 = vadd.f32 %v254, %v466
      %v468 = vpop.f32.mrb[0].mxu0
      %v469 = vpop.f32.mrb[0].mxu0
      %v470 = vadd.f32 %v254, %v469
      %v471 = vpop.f32.mrb[0].mxu0
      %472 = vmatprep.mubr.bf16.mxu0 0
      %473 = vmatmul.mubr.bf16.gmra.mrb[0].mxu0 %v325
      %v474 = vpop.f32.mrb[0].mxu0
      %v475 = vadd.f32 %v254, %v474
      %v476 = vpop.f32.mrb[0].mxu0
      %v477 = vpop.f32.mrb[0].mxu0
      %v478 = vadd.f32 %v254, %v477
      %v479 = vpop.f32.mrb[0].mxu0
      %480 = vmatprep.mubr.bf16.mxu0 0
      %481 = vmatmul.mubr.bf16.gmra.mrb[0].mxu0 %v326
      %v482 = vpop.f32.mrb[0].mxu0
      %v483 = vadd.f32 %v254, %v482
      %v484 = vpop.f32.mrb[0].mxu0
      %v485 = vpop.f32.mrb[0].mxu0
      %v486 = vadd.f32 %v254, %v485
      %v487 = vpop.f32.mrb[0].mxu0
      %488 = vmatprep.mubr.bf16.mxu0 0
      %489 = vmatmul.mubr.bf16.gmra.mrb[0].mxu0 %v327
      %v490 = vpop.f32.mrb[0].mxu0
      %v491 = vadd.f32 %v254, %v490
      %v492 = vpop.f32.mrb[0].mxu0
      %v493 = vpop.f32.mrb[0].mxu0
      %v494 = vadd.f32 %v254, %v493
      %v495 = vpop.f32.mrb[0].mxu0
      %496 = vmatprep.mubr.bf16.mxu0 0
      %497 = vmatmul.mubr.bf16.gmra.mrb[0].mxu0 %v328
      %v498 = vpop.f32.mrb[0].mxu0
      %v499 = vadd.f32 %v254, %v498
      %v500 = vpop.f32.mrb[0].mxu0
      %v501 = vpop.f32.mrb[0].mxu0
      %v502 = vadd.f32 %v254, %v501
      %v503 = vpop.f32.mrb[0].mxu0
      %504 = vmatprep.mubr.bf16.mxu0 0
      %505 = vmatmul.mubr.bf16.gmra.mrb[0].mxu0 %v329
      %v506 = vpop.f32.mrb[0].mxu0
      %v507 = vadd.f32 %v254, %v506
      %v508 = vpop.f32.mrb[0].mxu0
      %v509 = vpop.f32.mrb[0].mxu0
      %v510 = vadd.f32 %v254, %v509
      %v511 = vpop.f32.mrb[0].mxu0
      %512 = vmatprep.mubr.bf16.mxu0 0
      %513 = vmatmul.mubr.bf16.gmra.mrb[0].mxu0 %v330
      %v514 = vpop.f32.mrb[0].mxu0
      %v515 = vadd.f32 %v254, %v514
      %v516 = vpop.f32.mrb[0].mxu0
      %v517 = vpop.f32.mrb[0].mxu0
      %v518 = vadd.f32 %v254, %v517
      %v519 = vpop.f32.mrb[0].mxu0
      %520 = vmatprep.mubr.bf16.mxu0 0
      %521 = vmatmul.mubr.bf16.gmra.mrb[0].mxu0 %v331
      %v522 = vpop.f32.mrb[0].mxu0
      %v523 = vadd.f32 %v254, %v522
      %v524 = vpop.f32.mrb[0].mxu0
      %v525 = vpop.f32.mrb[0].mxu0
      %v526 = vadd.f32 %v254, %v525
      %v527 = vpop.f32.mrb[0].mxu0
      %528 = vmatprep.mubr.bf16.mxu0 0
      %529 = vmatmul.mubr.bf16.gmra.mrb[0].mxu0 %v332
      %v530 = vpop.f32.mrb[0].mxu0
      %v531 = vadd.f32 %v254, %v530
      %v532 = vpop.f32.mrb[0].mxu0
      %v533 = vpop.f32.mrb[0].mxu0
      %v534 = vadd.f32 %v254, %v533
      %v535 = vpop.f32.mrb[0].mxu0
      %536 = vmatprep.mubr.bf16.mxu0 0
      %537 = vmatmul.mubr.bf16.gmra.mrb[0].mxu0 %v333
      %v538 = vpop.f32.mrb[0].mxu0
      %v539 = vadd.f32 %v254, %v538
      %v540 = vpop.f32.mrb[0].mxu0
      %v541 = vpop.f32.mrb[0].mxu0
      %v542 = vadd.f32 %v254, %v541
      %v543 = vpop.f32.mrb[0].mxu0
      %544 = vmatprep.mubr.bf16.mxu0 0
      %545 = vmatmul.mubr.bf16.gmra.mrb[0].mxu0 %v334
      %v546 = vpop.f32.mrb[0].mxu0
      %v547 = vadd.f32 %v254, %v546
      %v548 = vpop.f32.mrb[0].mxu0
      %v549 = vpop.f32.mrb[0].mxu0
      %v550 = vadd.f32 %v254, %v549
      %v551 = vpop.f32.mrb[0].mxu0
      %552 = vmatprep.mubr.bf16.mxu0 0
      %553 = vmatmul.mubr.bf16.gmra.mrb[0].mxu0 %v335
      %v554 = vpop.f32.mrb[0].mxu0
      %v555 = vadd.f32 %v254, %v554
      %v556 = vpop.f32.mrb[0].mxu0
      %v557 = vpop.f32.mrb[0].mxu0
      %v558 = vadd.f32 %v254, %v557
      %v559 = vpop.f32.mrb[0].mxu0
      %560 = vdwg.mxu0
      %v561 = vxor.u32 %v435, 2147483648
      %v562 = vxor.u32 %v438, 2147483648
      %v563 = vxor.u32 %v443, 2147483648
      %v564 = vxor.u32 %v446, 2147483648
      %v565 = vxor.u32 %v451, 2147483648
      %v566 = vxor.u32 %v454, 2147483648
      %v567 = vxor.u32 %v459, 2147483648
      %v568 = vxor.u32 %v462, 2147483648
      %v569 = vxor.u32 %v467, 2147483648
      %v570 = vxor.u32 %v470, 2147483648
      %v571 = vxor.u32 %v475, 2147483648
      %v572 = vxor.u32 %v478, 2147483648
      %v573 = vxor.u32 %v483, 2147483648
      %v574 = vxor.u32 %v486, 2147483648
      %v575 = vxor.u32 %v491, 2147483648
      %v576 = vxor.u32 %v494, 2147483648
      %v577 = vxor.u32 %v499, 2147483648
      %v578 = vxor.u32 %v502, 2147483648
      %v579 = vxor.u32 %v507, 2147483648
      %v580 = vxor.u32 %v510, 2147483648
      %v581 = vxor.u32 %v515, 2147483648
      %v582 = vxor.u32 %v518, 2147483648
      %v583 = vxor.u32 %v523, 2147483648
      %v584 = vxor.u32 %v526, 2147483648
      %v585 = vxor.u32 %v531, 2147483648
      %v586 = vxor.u32 %v534, 2147483648
      %v587 = vxor.u32 %v539, 2147483648
      %v588 = vxor.u32 %v542, 2147483648
      %v589 = vxor.u32 %v547, 2147483648
      %v590 = vxor.u32 %v550, 2147483648
      %v591 = vxor.u32 %v555, 2147483648
      %v592 = vxor.u32 %v558, 2147483648
      %v593 = vmul.f32 %v561, 1.442695
      %v594 = vpow.pop %v593
      %v595 = vmul.f32 %v562, 1.442695
      %v596 = vpow.pop %v595
      %v597 = vmul.f32 %v563, 1.442695
      %v598 = vpow.pop %v597
      %v599 = vmul.f32 %v564, 1.442695
      %v600 = vpow.pop %v599
      %v601 = vmul.f32 %v565, 1.442695
      %v602 = vpow.pop %v601
      %v603 = vmul.f32 %v566, 1.442695
      %v604 = vpow.pop %v603
      %v605 = vmul.f32 %v567, 1.442695
      %v606 = vpow.pop %v605
      %v607 = vmul.f32 %v568, 1.442695
      %v608 = vpow.pop %v607
      %v609 = vmul.f32 %v569, 1.442695
      %v610 = vpow.pop %v609
      %v611 = vmul.f32 %v570, 1.442695
      %v612 = vpow.pop %v611
      %v613 = vmul.f32 %v571, 1.442695
      %v614 = vpow.pop %v613
      %v615 = vmul.f32 %v572, 1.442695
      %v616 = vpow.pop %v615
      %v617 = vmul.f32 %v573, 1.442695
      %v618 = vpow.pop %v617
      %v619 = vmul.f32 %v574, 1.442695
      %v620 = vpow.pop %v619
      %v621 = vmul.f32 %v575, 1.442695
      %v622 = vpow.pop %v621
      %v623 = vmul.f32 %v576, 1.442695
      %v624 = vpow.pop %v623
      %v625 = vmul.f32 %v577, 1.442695
      %v626 = vpow.pop %v625
      %v627 = vmul.f32 %v578, 1.442695
      %v628 = vpow.pop %v627
      %v629 = vmul.f32 %v579, 1.442695
      %v630 = vpow.pop %v629
      %v631 = vmul.f32 %v580, 1.442695
      %v632 = vpow.pop %v631
      %v633 = vmul.f32 %v581, 1.442695
      %v634 = vpow.pop %v633
      %v635 = vmul.f32 %v582, 1.442695
      %v636 = vpow.pop %v635
      %v637 = vmul.f32 %v583, 1.442695
      %v638 = vpow.pop %v637
      %v639 = vmul.f32 %v584, 1.442695
      %v640 = vpow.pop %v639
      %v641 = vmul.f32 %v585, 1.442695
      %v642 = vpow.pop %v641
      %v643 = vmul.f32 %v586, 1.442695
      %v644 = vpow.pop %v643
      %v645 = vmul.f32 %v587, 1.442695
      %v646 = vpow.pop %v645
      %v647 = vmul.f32 %v588, 1.442695
      %v648 = vpow.pop %v647
      %v649 = vmul.f32 %v589, 1.442695
      %v650 = vpow.pop %v649
      %v651 = vmul.f32 %v590, 1.442695
      %v652 = vpow.pop %v651
      %v653 = vmul.f32 %v591, 1.442695
      %v654 = vpow.pop %v653
      %v655 = vmul.f32 %v592, 1.442695
      %v656 = vpow.pop %v655
      %v657 = vadd.f32 %v594, 1.0
      %v658 = vadd.f32 %v596, 1.0
      %v659 = vadd.f32 %v598, 1.0
      %v660 = vadd.f32 %v600, 1.0
      %v661 = vadd.f32 %v602, 1.0
      %v662 = vadd.f32 %v604, 1.0
      %v663 = vadd.f32 %v606, 1.0
      %v664 = vadd.f32 %v608, 1.0
      %v665 = vadd.f32 %v610, 1.0
      %v666 = vadd.f32 %v612, 1.0
      %v667 = vadd.f32 %v614, 1.0
      %v668 = vadd.f32 %v616, 1.0
      %v669 = vadd.f32 %v618, 1.0
      %v670 = vadd.f32 %v620, 1.0
      %v671 = vadd.f32 %v622, 1.0
      %v672 = vadd.f32 %v624, 1.0
      %v673 = vadd.f32 %v626, 1.0
      %v674 = vadd.f32 %v628, 1.0
      %v675 = vadd.f32 %v630, 1.0
      %v676 = vadd.f32 %v632, 1.0
      %v677 = vadd.f32 %v634, 1.0
      %v678 = vadd.f32 %v636, 1.0
      %v679 = vadd.f32 %v638, 1.0
      %v680 = vadd.f32 %v640, 1.0
      %v681 = vadd.f32 %v642, 1.0
      %v682 = vadd.f32 %v644, 1.0
      %v683 = vadd.f32 %v646, 1.0
      %v684 = vadd.f32 %v648, 1.0
      %v685 = vadd.f32 %v650, 1.0
      %v686 = vadd.f32 %v652, 1.0
      %v687 = vadd.f32 %v654, 1.0
      %v688 = vadd.f32 %v656, 1.0
      %v689 = vrcp.pop %v657
      %v690 = vmul.f32 1.0, %v689
      %v691 = vrcp.pop %v658
      %v692 = vmul.f32 1.0, %v691
      %v693 = vrcp.pop %v659
      %v694 = vmul.f32 1.0, %v693
      %v695 = vrcp.pop %v660
      %v696 = vmul.f32 1.0, %v695
      %v697 = vrcp.pop %v661
      %v698 = vmul.f32 1.0, %v697
      %v699 = vrcp.pop %v662
      %v700 = vmul.f32 1.0, %v699
      %v701 = vrcp.pop %v663
      %v702 = vmul.f32 1.0, %v701
      %v703 = vrcp.pop %v664
      %v704 = vmul.f32 1.0, %v703
      %v705 = vrcp.pop %v665
      %v706 = vmul.f32 1.0, %v705
      %v707 = vrcp.pop %v666
      %v708 = vmul.f32 1.0, %v707
      %v709 = vrcp.pop %v667
      %v710 = vmul.f32 1.0, %v709
      %v711 = vrcp.pop %v668
      %v712 = vmul.f32 1.0, %v711
      %v713 = vrcp.pop %v669
      %v714 = vmul.f32 1.0, %v713
      %v715 = vrcp.pop %v670
      %v716 = vmul.f32 1.0, %v715
      %v717 = vrcp.pop %v671
      %v718 = vmul.f32 1.0, %v717
      %v719 = vrcp.pop %v672
      %v720 = vmul.f32 1.0, %v719
      %v721 = vrcp.pop %v673
      %v722 = vmul.f32 1.0, %v721
      %v723 = vrcp.pop %v674
      %v724 = vmul.f32 1.0, %v723
      %v725 = vrcp.pop %v675
      %v726 = vmul.f32 1.0, %v725
      %v727 = vrcp.pop %v676
      %v728 = vmul.f32 1.0, %v727
      %v729 = vrcp.pop %v677
      %v730 = vmul.f32 1.0, %v729
      %v731 = vrcp.pop %v678
      %v732 = vmul.f32 1.0, %v731
      %v733 = vrcp.pop %v679
      %v734 = vmul.f32 1.0, %v733
      %v735 = vrcp.pop %v680
      %v736 = vmul.f32 1.0, %v735
      %v737 = vrcp.pop %v681
      %v738 = vmul.f32 1.0, %v737
      %v739 = vrcp.pop %v682
      %v740 = vmul.f32 1.0, %v739
      %v741 = vrcp.pop %v683
      %v742 = vmul.f32 1.0, %v741
      %v743 = vrcp.pop %v684
      %v744 = vmul.f32 1.0, %v743
      %v745 = vrcp.pop %v685
      %v746 = vmul.f32 1.0, %v745
      %v747 = vrcp.pop %v686
      %v748 = vmul.f32 1.0, %v747
      %v749 = vrcp.pop %v687
      %v750 = vmul.f32 1.0, %v749
      %v751 = vrcp.pop %v688
      %v752 = vmul.f32 1.0, %v751
      %v753 = vmul.f32 %v435, %v690
      %v754 = vmul.f32 %v438, %v692
      %v755 = vmul.f32 %v443, %v694
      %v756 = vmul.f32 %v446, %v696
      %v757 = vmul.f32 %v451, %v698
      %v758 = vmul.f32 %v454, %v700
      %v759 = vmul.f32 %v459, %v702
      %v760 = vmul.f32 %v462, %v704
      %v761 = vmul.f32 %v467, %v706
      %v762 = vmul.f32 %v470, %v708
      %v763 = vmul.f32 %v475, %v710
      %v764 = vmul.f32 %v478, %v712
      %v765 = vmul.f32 %v483, %v714
      %v766 = vmul.f32 %v486, %v716
      %v767 = vmul.f32 %v491, %v718
      %v768 = vmul.f32 %v494, %v720
      %v769 = vmul.f32 %v499, %v722
      %v770 = vmul.f32 %v502, %v724
      %v771 = vmul.f32 %v507, %v726
      %v772 = vmul.f32 %v510, %v728
      %v773 = vmul.f32 %v515, %v730
      %v774 = vmul.f32 %v518, %v732
      %v775 = vmul.f32 %v523, %v734
      %v776 = vmul.f32 %v526, %v736
      %v777 = vmul.f32 %v531, %v738
      %v778 = vmul.f32 %v534, %v740
      %v779 = vmul.f32 %v539, %v742
      %v780 = vmul.f32 %v542, %v744
      %v781 = vmul.f32 %v547, %v746
      %v782 = vmul.f32 %v550, %v748
      %v783 = vmul.f32 %v555, %v750
      %v784 = vmul.f32 %v558, %v752
      %v785 = vld [vmem:[%s194] sm:$0x1]
      %v786 = vadd.f32 %v753, %v754
      %v787 = vadd.f32 %v786, %v755
      %v788 = vadd.f32 %v787, %v756
      %v789 = vadd.f32 %v788, %v757
      %v790 = vadd.f32 %v789, %v758
      %v791 = vadd.f32 %v790, %v759
      %v792 = vadd.f32 %v791, %v760
      %v793 = vadd.f32 %v792, %v761
      %v794 = vadd.f32 %v793, %v762
      %v795 = vadd.f32 %v794, %v763
      %v796 = vadd.f32 %v795, %v764
      %v797 = vadd.f32 %v796, %v765
      %v798 = vadd.f32 %v797, %v766
      %v799 = vadd.f32 %v798, %v767
      %v800 = vadd.f32 %v799, %v768
      %v801 = vadd.f32 %v800, %v769
      %v802 = vadd.f32 %v801, %v770
      %v803 = vadd.f32 %v802, %v771
      %v804 = vadd.f32 %v803, %v772
      %v805 = vadd.f32 %v804, %v773
      %v806 = vadd.f32 %v805, %v774
      %v807 = vadd.f32 %v806, %v775
      %v808 = vadd.f32 %v807, %v776
      %v809 = vadd.f32 %v808, %v777
      %v810 = vadd.f32 %v809, %v778
      %v811 = vadd.f32 %v810, %v779
      %v812 = vadd.f32 %v811, %v780
      %v813 = vadd.f32 %v812, %v781
      %v814 = vadd.f32 %v813, %v782
      %v815 = vadd.f32 %v814, %v783
      %v816 = vadd.f32 %v815, %v784
      %v817 = vrot.slane %v816, 4
      %v818 = vadd.f32 %v816, %v817
      %v819 = vrot.slane %v818, 2
      %v820 = vadd.f32 %v818, %v819
      %v821 = vrot.slane %v820, 1
      %v822 = vadd.f32 %v820, %v821
      %v823 = vadd.f32 %v785, %v822
      %824 = vst [vmem:[%s194] sm:$0x1] %v823
      // Predicated region
      $region37: #{efficientnet_arcface_forward.3} parent=31 // pred_check
        %p825 = pneg %p196
      $region38: #{efficientnet_arcface_forward.3} parent=31 // pred_check_branch
        %827 = sbr.rel (%p825) target = $region40
      $region39: #{efficientnet_arcface_forward.3} parent=31 // pred_region
        %v828 = vld [vmem:[%s194] sm:$0x1]
        %v829 = vmul.f32 %v828, 0.00390625
        %830 = vst [vmem:[%s194] sm:$0x1] %v829
      $region40: #{efficientnet_arcface_forward.3} parent=31 // pred_fallthru
        _
      %p831 = scmp.lt.s32.totalorder %s18, 1
      %s832 = scalar_select %p831, %s18, 1
      %s833 = scalar_lea.vmem %s3, %s832
      // Predicated region
      $region41: #{efficientnet_arcface_forward.3} parent=31 // pred_check
        %p834 = pneg %p114
      $region42: #{efficientnet_arcface_forward.3} parent=31 // pred_check_branch
        %836 = sbr.rel (%p834) target = $region44
      $region43: #{efficientnet_arcface_forward.3} parent=31 // pred_region
        _
      $region44: #{efficientnet_arcface_forward.3} parent=31 // pred_fallthru
        _
    $region32: #{efficientnet_arcface_forward.3} parent=5 // pred_fallthru
      _
    %p837 = scmp.le.s32.totalorder 2, %s9
    // Predicated region
    $region45: #{efficientnet_arcface_forward.3} parent=5 // pred_check
      %p838 = pneg %p837
    $region46: #{efficientnet_arcface_forward.3} parent=5 // pred_check_branch
      %840 = sbr.rel (%p838) target = $region48
    $region47: #{efficientnet_arcface_forward.3} parent=5 // pred_region
      %s841 = ssub.s32 %s9, 2
      // Predicated region
      $region49: #{efficientnet_arcface_forward.3} parent=47 // pred_check
        %p842 = pneg %p120
      $region50: #{efficientnet_arcface_forward.3} parent=47 // pred_check_branch
        %844 = sbr.rel (%p842) target = $region52
      $region51: #{efficientnet_arcface_forward.3} parent=47 // pred_region
        %p845 = scmp.lt.s32.totalorder %s20, 1
        %s846 = scalar_select %p845, %s20, 1
        %s847 = scalar_lea.vmem %s3, %s846
      $region52: #{efficientnet_arcface_forward.3} parent=47 // pred_fallthru
        _
    $region48: #{efficientnet_arcface_forward.3} parent=5 // pred_fallthru
      _
  $region6: #{efficientnet_arcface_forward.3} parent=0 // loop_footer
    %s13 = sadd.s32 1, %s9
  $region7: #{efficientnet_arcface_forward.3} parent=0 // loop_footer_branch
    %8 = sbr.rel target = $region3
  $region8: #{efficientnet_arcface_forward.3} parent=0 // loop_exit
    _

// kernel: efficientnet_arcface_forward.5
$region0: #{efficientnet_arcface_forward.5}
  #allocation0 [shape = 'u32[]', space=smem, size = 0x4, offset = 0x4, fixed_abs, tag = 'smem constant byte address 0x4 - core index']
  #allocation1 [shape = 'u32[144,128]{1,0:T(1,128)}', space=vmem, size = 0x12000, scoped, tag = 'internal scratch']
  %s0 = inlined_call_operand.vmem [shape: bf16[2,128], index: 0, kind: input, shape index: {}]
  %s1 = inlined_call_operand.vmem [shape: bf16[128,128], index: 1, kind: input, shape index: {}]
  %s2 = inlined_call_operand.vmem [shape: s32[2,1], index: 2, kind: input, shape index: {}]
  %s3 = inlined_call_operand.hbm [shape: f32[2,128], index: 3, kind: output, shape index: {}]
  %s4 = sld [smem:[#allocation0]]
  $region22: #{efficientnet_arcface_forward.5} parent=0
    _
  %s6 = ssub.s32 1, %s4
  %s7 = scalar_select 0, %s6, %s4
  $region1: #{efficientnet_arcface_forward.5} parent=0
    #allocation2 [shape = 'u8[1024]{0}', space=vmem, size = 0x400, scoped, tag = 'output window, operand 0, single buffered']
    #allocation3 [shape = 's32[1]{0}', space=sflag, size = 0x4, scoped, tag = 'scoped memory for efficientnet_arcface_forward.5']
    %8 = vsyncpa [#allocation3], 0
    // Predicated region
    $region2: #{efficientnet_arcface_forward.5} parent=1 // pred_check
      _
    $region3: #{efficientnet_arcface_forward.5} parent=1 // pred_check_branch
      %10 = sbr.rel (0) target = $region5
    $region4: #{efficientnet_arcface_forward.5} parent=1 // pred_region
      _
    $region5: #{efficientnet_arcface_forward.5} parent=1 // pred_fallthru
      _
    // Predicated region
    $region6: #{efficientnet_arcface_forward.5} parent=1 // pred_check
      _
    $region7: #{efficientnet_arcface_forward.5} parent=1 // pred_check_branch
      %12 = sbr.rel (0) target = $region9
    $region8: #{efficientnet_arcface_forward.5} parent=1 // pred_region
      _
    $region9: #{efficientnet_arcface_forward.5} parent=1 // pred_fallthru
      _
    // Predicated region
    $region10: #{efficientnet_arcface_forward.5} parent=1 // pred_check
      _
    $region11: #{efficientnet_arcface_forward.5} parent=1 // pred_check_branch
      %14 = sbr.rel (0) target = $region13
    $region12: #{efficientnet_arcface_forward.5} parent=1 // pred_region
      _
    $region13: #{efficientnet_arcface_forward.5} parent=1 // pred_fallthru
      _
    %v16 = vld [vmem:[%s0] sm:$0x1]
    %v17 = vld [vmem:[%s1] sm:$0xf]
    %v18 = vld [vmem:[%s1 + $0x4] sm:$0xf]
    %v19 = vld [vmem:[%s1 + $0x8] sm:$0xf]
    %v20 = vld [vmem:[%s1 + $0xc] sm:$0xf]
    %v21 = vld [vmem:[%s1 + $0x10] sm:$0xf]
    %v22 = vld [vmem:[%s1 + $0x14] sm:$0xf]
    %v23 = vld [vmem:[%s1 + $0x18] sm:$0xf]
    %v24 = vld [vmem:[%s1 + $0x1c] sm:$0xf]
    %v25 = vld [vmem:[%s1 + $0x20] sm:$0xf]
    %v26 = vld [vmem:[%s1 + $0x24] sm:$0xf]
    %v27 = vld [vmem:[%s1 + $0x28] sm:$0xf]
    %v28 = vld [vmem:[%s1 + $0x2c] sm:$0xf]
    %v29 = vld [vmem:[%s1 + $0x30] sm:$0xf]
    %v30 = vld [vmem:[%s1 + $0x34] sm:$0xf]
    %v31 = vld [vmem:[%s1 + $0x38] sm:$0xf]
    %v32 = vld [vmem:[%s1 + $0x3c] sm:$0xf]
    %v49 = vunpack.c.l.b16 %v17
    %v50 = vunpack.c.l.b16 %v18
    %v51 = vunpack.c.l.b16 %v19
    %v52 = vunpack.c.l.b16 %v20
    %v53 = vunpack.c.l.b16 %v21
    %v54 = vunpack.c.l.b16 %v22
    %v55 = vunpack.c.l.b16 %v23
    %v56 = vunpack.c.l.b16 %v24
    %v57 = vunpack.c.l.b16 %v25
    %v58 = vunpack.c.l.b16 %v26
    %v59 = vunpack.c.l.b16 %v27
    %v60 = vunpack.c.l.b16 %v28
    %v61 = vunpack.c.l.b16 %v29
    %v62 = vunpack.c.l.b16 %v30
    %v63 = vunpack.c.l.b16 %v31
    %v64 = vunpack.c.l.b16 %v32
    %v65 = vpack.c.b16 %v50, %v49
    %v66 = vpack.c.b16 %v52, %v51
    %v67 = vpack.c.b16 %v54, %v53
    %v68 = vpack.c.b16 %v56, %v55
    %v69 = vpack.c.b16 %v58, %v57
    %v70 = vpack.c.b16 %v60, %v59
    %v71 = vpack.c.b16 %v62, %v61
    %v72 = vpack.c.b16 %v64, %v63
    %81 = vmatprep.subr.bf16.mxu0 0
    %82 = vmatpush1.bf16.msra.mxu0 %v65
    %83 = vmatprep.subr.bf16.mxu0 0
    %84 = vmatpush1.bf16.msra.mxu0 %v66
    %85 = vmatprep.subr.bf16.mxu0 0
    %86 = vmatpush1.bf16.msra.mxu0 %v67
    %87 = vmatprep.subr.bf16.mxu0 0
    %88 = vmatpush1.bf16.msra.mxu0 %v68
    %89 = vmatprep.subr.bf16.mxu0 0
    %90 = vmatpush1.bf16.msra.mxu0 %v69
    %91 = vmatprep.subr.bf16.mxu0 0
    %92 = vmatpush1.bf16.msra.mxu0 %v70
    %93 = vmatprep.subr.bf16.mxu0 0
    %94 = vmatpush1.bf16.msra.mxu0 %v71
    %95 = vmatprep.subr.bf16.mxu0 0
    %96 = vmatpush1.bf16.msra.mxu0 %v72
    %97 = vmatprep.subr.bf16.mxu0 0
    %98 = vmatpush1.bf16.msra.mxu0 0
    %99 = vmatprep.subr.bf16.mxu0 0
    %100 = vmatpush1.bf16.msra.mxu0 0
    %101 = vmatprep.subr.bf16.mxu0 0
    %102 = vmatpush1.bf16.msra.mxu0 0
    %103 = vmatprep.subr.bf16.mxu0 0
    %104 = vmatpush1.bf16.msra.mxu0 0
    %105 = vmatprep.subr.bf16.mxu0 0
    %106 = vmatpush1.bf16.msra.mxu0 0
    %107 = vmatprep.subr.bf16.mxu0 0
    %108 = vmatpush1.bf16.msra.mxu0 0
    %109 = vmatprep.subr.bf16.mxu0 0
    %110 = vmatpush1.bf16.msra.mxu0 0
    %111 = vmatprep.subr.bf16.mxu0 0
    %112 = vmatpush1.bf16.msra.mxu0 0
    %113 = vmatprep.mubr.bf16.mxu0 0
    %114 = vmatmul.mubr.bf16.gmra.mrb[0].mxu0 %v16
    %v115 = vpop.f32.mrb[0].mxu0
    %v116 = vadd.f32 0.0, %v115
    %v117 = vpop.f32.mrb[0].mxu0
    %v118 = vpop.f32.mrb[0].mxu0
    %v119 = vpop.f32.mrb[0].mxu0
    %120 = vdwg.mxu0
    %v121 = vmax.f32 %v116, -1.0
    %v122 = vmin.f32 %v121, 1.0
    %v123 = vmul.f32 %v122, %v122
    %v124 = vsub.f32 1.0, %v123
    %v125 = vmax.f32 %v124, 0.0
    %v126 = vrsqrt.pop %v125
    %v127 = vmul.f32 %v125, %v126
    %vm128 = vcmp.eq.f32.partialorder %v125, inf
    %v129 = vsel %vm128, %v125, %v127
    %vm130 = vcmp.eq.f32.partialorder %v125, 0.0
    %v131 = vand.u32 %v125, 2147483648
    %v132 = vsel %vm130, %v131, %v129
    %v133 = vmul.f32 %v122, 0.87758255
    %v134 = vmul.f32 %v132, 0.47942555
    %v135 = vsub.f32 %v133, %v134
    %vm136 = vcmp.gt.f32.partialorder %v122, -0.87758255
    %v137 = vsub.f32 %v122, 0.23971277
    %v138 = vsel %vm136, %v135, %v137
    %v139 = vld [vmem:[%s2] sm:$0x3]
    %s140 = smul.u32 0, 128
    %v141 = vlaneseq
    %v142 = vand.u32 %v141, 127
    %v143 = vstv %s140
    %v144 = vadd.s32 %v143, %v142
    %145 = vset.pattern.permute.xlu0 0
    %146 = vperm.xlu0 %145, %v139
    %v147 = vpop.permute.xlu0 %146
    %vm148 = vcmp.eq.s32.totalorder %v144, %v147
    %v149 = vsel %vm148, 1, 0
    %v150 = vcvt.s32.f32 %v149
    %v151 = vmul.f32 %v150, %v138
    %v152 = vsub.f32 1.0, %v150
    %v153 = vmul.f32 %v152, %v122
    %v154 = vadd.f32 %v151, %v153
    %v155 = vmul.f32 %v154, 10.0
    %156 = vst [vmem:[#allocation2] sm:$0x3] %v155
    // Predicated region
    $region14: #{efficientnet_arcface_forward.5} parent=1 // pred_check
      _
    $region15: #{efficientnet_arcface_forward.5} parent=1 // pred_check_branch
      %158 = sbr.rel (0) target = $region17
    $region16: #{efficientnet_arcface_forward.5} parent=1 // pred_region
      %s160 = ssub.s32 32, 32
      %161 = vsyncadd [#allocation3], %s160
      %s163 = sshll.u32 [#allocation2], 4
      %s164 = int_to_ptr.vmem [resolvable:$true] %s163
      %166 = dma.vmem_to_hbm [thread:$0]  %s164, 32, %s3, [#allocation3]
    $region17: #{efficientnet_arcface_forward.5} parent=1 // pred_fallthru
      _
    // Predicated region
    $region18: #{efficientnet_arcface_forward.5} parent=1 // pred_check
      _
    $region19: #{efficientnet_arcface_forward.5} parent=1 // pred_check_branch
      %168 = sbr.rel (0) target = $region21
    $region20: #{efficientnet_arcface_forward.5} parent=1 // pred_region
      %169 = dma.done [#allocation3], 32
    $region21: #{efficientnet_arcface_forward.5} parent=1 // pred_fallthru
      _
    %170 = vsyncpa [#allocation3], 1

</llo_original>
